<compile_context>
chip_gen: v5e
topology: v5e:2x2
jax: 0.10.0
libtpu: 0.0.40
codegen_flags: <defaults>
</compile_context>

<pallas_src>
import functools

import jax
import jax.numpy as jnp
from jax.experimental import pallas as pl
from jax.experimental.pallas import tpu as pltpu

LANE = 128        # TPU vreg lane width
OUT_LANES = 128   # lane-dense output slab width


def _round_up(n, m):
    return ((n + m - 1) // m) * m


def _lstm_kernel(xw_ref, whh_ref, lin_w_ref, lin_b_ref, out_ref, *,
                 hidden, gate_padded, seq_len):
    """LSTM recurrence + final linear for one batch tile (operands in VMEM).

    xw_ref    : (T, TB, GP) f32  x @ Wih^T + (b_ih+b_hh), packed [i,f,g,o], time-major
    whh_ref   : (GP, GP)    f32  rows [0:H) = Whh^T, rows [H:GP) zero
    lin_w_ref : (1, GP)     f32  linear.weight row, zero past H
    lin_b_ref : (1, 1)      f32  linear.bias
    out_ref   : (TB, 128)   f32  linear(h_T) broadcast across lanes
    """
    H = hidden
    GP = gate_padded
    T = seq_len
    TB = xw_ref.shape[1]

    whh = whh_ref[...]                               # (GP, GP), resident

    # h/c live in lanes [0:H); lanes [H:GP) accumulate bounded garbage that is
    # annihilated exactly by the zero whh rows / zero lin_w tail (0 * finite = 0).
    h = jnp.zeros((TB, GP), jnp.float32)
    c = jnp.zeros((TB, GP), jnp.float32)

    # seq_len is small & static -> unrolled recurrence with static indexing.
    # TODO(synk): switch to lax.fori_loop(unroll=True) if sequence_length grows
    # beyond ~16 (code size / vreg live ranges).
    for t in range(T):
        # Only h @ Whh^T is on the serial critical path (xw precomputed).
        gates = xw_ref[t] + jnp.dot(h, whh, preferred_element_type=jnp.float32)
        # One sigmoid + one tanh over the whole packed slab (EUP), then align
        # each gate block onto lanes [0:H) with XLU rolls (np.roll semantics).
        sig = jax.nn.sigmoid(gates)                  # valid on i/f/o lane blocks
        tnh = jnp.tanh(gates)                        # valid on the g lane block
        i_g = sig                                    # [0:H)     already aligned
        f_g = pltpu.roll(sig, GP - 1 * H, axis=1)    # [H:2H)   -> [0:H)
        g_g = pltpu.roll(tnh, GP - 2 * H, axis=1)    # [2H:3H)  -> [0:H)
        o_g = pltpu.roll(sig, GP - 3 * H, axis=1)    # [3H:4H)  -> [0:H)
        c = f_g * c + i_g * g_g
        h = o_g * jnp.tanh(c)

    # Final hidden->1 linear: VPU multiply + XLU lane reduction (no N=1 MXU).
    y = jnp.sum(h * lin_w_ref[...], axis=-1, keepdims=True) + lin_b_ref[...]
    # Lane-dense store: broadcast the per-row scalar across all 128 lanes.
    out_ref[...] = jnp.broadcast_to(y, out_ref.shape)


def prepare_params(raw, *, num_features, hidden):
    """One-time prep: transpose, fuse biases, keep gates packed [i,f,g,o] and
    pad only the packed 4H axis (and whh rows) up to a 128-lane multiple."""
    H = hidden
    F = num_features
    GP = max(LANE, _round_up(4 * H, LANE))

    wih = raw["weight_ih"].astype(jnp.float32)                  # (4H, F)
    whh = raw["weight_hh"].astype(jnp.float32)                  # (4H, H)
    b = (raw["bias_ih"] + raw["bias_hh"]).astype(jnp.float32)   # (4H,)

    wih_packed = jnp.zeros((F, GP), jnp.float32).at[:, :4 * H].set(wih.T)
    whh_packed = jnp.zeros((GP, GP), jnp.float32).at[:H, :4 * H].set(whh.T)
    bias_packed = jnp.zeros((1, GP), jnp.float32).at[0, :4 * H].set(b)
    lin_w_packed = jnp.zeros((1, GP), jnp.float32).at[0, :H].set(
        raw["linear_w"].astype(jnp.float32)[0])
    lin_b = raw["linear_b"].astype(jnp.float32).reshape(1, 1)

    return {
        "wih_packed": wih_packed, "whh_packed": whh_packed,
        "bias_packed": bias_packed, "lin_w_packed": lin_w_packed,
        "lin_b": lin_b, "gate_padded": GP, "hidden": H,
    }


def sample_lstm_forward(x, prepared, *, sequence_length, num_features,
                        batch_tile=None):
    """Mirrors SampleLSTM.forward: reshape -> LSTM -> linear(hn[0]) -> flatten.

    batch_tile=None (default): whole padded batch in one grid step (best on
    single-TC v5e/v6e).  On v7x pass batch_tile = round_up(ceil(Bp/2), 8) so
    exactly one tile lands on each TensorCore.
    """
    B = x.shape[0]
    T, F = sequence_length, num_features
    GP = prepared["gate_padded"]
    H = prepared["hidden"]

    x = x.reshape(B, T, F).astype(jnp.float32)

    # Hoisted input projection as a single dense XLA matmul (bias folded once).
    # Keeping it out of the kernel avoids many tiny strided x DMAs and a
    # degenerate K=F in-kernel MXU matmul; only the recurrence needs Pallas.
    xw = jnp.einsum("btf,fg->btg", x, prepared["wih_packed"]) \
        + prepared["bias_packed"]                              # (B, T, GP)

    if batch_tile is None:
        TB = _round_up(B, 8)            # one grid step
    else:
        assert batch_tile % 8 == 0, "batch_tile must be a multiple of 8"
        TB = batch_tile
    Bp = _round_up(B, TB)
    if Bp != B:
        xw = jnp.pad(xw, ((0, Bp - B), (0, 0), (0, 0)))
    # Time-major so per-step reads in the kernel are leading-dim slices.
    xw_tm = jnp.transpose(xw, (1, 0, 2))                       # (T, Bp, GP)

    kernel = functools.partial(_lstm_kernel, hidden=H, gate_padded=GP,
                               seq_len=T)
    grid = (Bp // TB,)

    out = pl.pallas_call(
        kernel,
        out_shape=jax.ShapeDtypeStruct((Bp, OUT_LANES), jnp.float32),
        grid_spec=pltpu.PrefetchScalarGridSpec(
            num_scalar_prefetch=0,
            grid=grid,
            in_specs=[
                pl.BlockSpec((T, TB, GP), lambda i: (0, i, 0)),  # lane-dense xw tile
                pl.BlockSpec((GP, GP), lambda i: (0, 0)),        # grid-invariant weights
                pl.BlockSpec((1, GP), lambda i: (0, 0)),
                pl.BlockSpec((1, 1), lambda i: (0, 0)),
            ],
            out_specs=pl.BlockSpec((TB, OUT_LANES), lambda i: (i, 0)),
        ),
        compiler_params=pltpu.CompilerParams(
            dimension_semantics=("parallel",),   # shards tiles across TCs on v7x
        ),
    )(xw_tm, prepared["whh_packed"], prepared["lin_w_packed"],
      prepared["lin_b"])

    # .flatten() in the PyTorch module; drop lane broadcast + batch padding.
    return out[:B, 0]


def _reference_forward(x, raw, *, sequence_length, num_features, hidden):
    """Pure-JAX reference (PyTorch LSTM semantics) to check the kernel."""
    B = x.shape[0]
    x = x.reshape(B, sequence_length, num_features).astype(jnp.float32)
    wih_t = raw["weight_ih"].T
    whh_t = raw["weight_hh"].T
    bias = raw["bias_ih"] + raw["bias_hh"]
    H = hidden
    h = jnp.zeros((B, H), jnp.float32)
    c = jnp.zeros((B, H), jnp.float32)
    for t in range(sequence_length):
        gates = x[:, t, :] @ wih_t + h @ whh_t + bias
        i_g = jax.nn.sigmoid(gates[:, 0 * H:1 * H])
        f_g = jax.nn.sigmoid(gates[:, 1 * H:2 * H])
        g_g = jnp.tanh(gates[:, 2 * H:3 * H])
        o_g = jax.nn.sigmoid(gates[:, 3 * H:4 * H])
        c = f_g * c + i_g * g_g
        h = o_g * jnp.tanh(c)
    return (h @ raw["linear_w"].T + raw["linear_b"]).reshape(B)


def init_params(key, *, num_features, hidden):
    """Deterministic init mimicking PyTorch's U(-1/sqrt(H), 1/sqrt(H))."""
    k = jax.random.split(key, 6)
    bound = 1.0 / jnp.sqrt(hidden)
    u = lambda kk, shape: jax.random.uniform(kk, shape, jnp.float32,
                                             minval=-bound, maxval=bound)
    return {
        "weight_ih": u(k[0], (4 * hidden, num_features)),  # (4H, F), [i,f,g,o]
        "weight_hh": u(k[1], (4 * hidden, hidden)),        # (4H, H)
        "bias_ih":   u(k[2], (4 * hidden,)),
        "bias_hh":   u(k[3], (4 * hidden,)),
        "linear_w":  u(k[4], (1, hidden)),                 # (1, H)
        "linear_b":  u(k[5], (1,)),
    }


if __name__ == "__main__":
    # Shapes from the original script: batch_size=60, sequence_length=6;
    # 4 features per element, hidden size 32 (4H == one 128-lane vreg).
    BATCH = 60
    SEQ = 6
    FEAT = 4
    HIDDEN = 32

    key = jax.random.PRNGKey(0)
    k_x, k_p = jax.random.split(key)
    # Input in the flat form the module reshapes from: (B, SEQ*FEAT).
    x = jax.random.normal(k_x, (BATCH, SEQ * FEAT), jnp.float32)
    raw = init_params(k_p, num_features=FEAT, hidden=HIDDEN)
    prepared = prepare_params(raw, num_features=FEAT, hidden=HIDDEN)  # once

    out = sample_lstm_forward(x, prepared, sequence_length=SEQ,
                              num_features=FEAT)
    out = jax.block_until_ready(out)

    ref = _reference_forward(x, raw, sequence_length=SEQ,
                             num_features=FEAT, hidden=HIDDEN)
    assert out.shape == (BATCH,), out.shape
    assert jnp.allclose(out, ref, atol=2e-5, rtol=2e-5), (out, ref)

    print("KERNEL_OK")
</pallas_src>

<mosaic_0001>
module attributes {stable_mosaic.version = 11 : i64} {
  func.func @_lstm_kernel(%arg0: i32, %arg1: memref<6x64x128xf32, #tpu.memory_space<vmem>>, %arg2: memref<128x128xf32, #tpu.memory_space<vmem>>, %arg3: memref<1x128xf32, #tpu.memory_space<vmem>>, %arg4: memref<1x1xf32, #tpu.memory_space<vmem>>, %arg5: memref<64x128xf32, #tpu.memory_space<vmem>>) attributes {dimension_semantics = [#tpu.dimension_semantics<parallel>], iteration_bounds = array<i64: 1>, scalar_prefetch = 0 : i64, scratch_operands = 0 : i64, tpu.core_type = #tpu.core_type<tc>, window_params = [{transform_indices = @transform_0, window_bounds = array<i64: 6, 64, 128>}, {pipeline_mode = #tpu.pipeline_mode<synchronous>, transform_indices = @transform_1, window_bounds = array<i64: 128, 128>}, {pipeline_mode = #tpu.pipeline_mode<synchronous>, transform_indices = @transform_2, window_bounds = array<i64: 1, 128>}, {pipeline_mode = #tpu.pipeline_mode<synchronous>, transform_indices = @transform_3, window_bounds = array<i64: 1, 1>}, {transform_indices = @transform_4, window_bounds = array<i64: 64, 128>}]} {
    %c0 = arith.constant 0 : index
    %c0_0 = arith.constant 0 : index
    %0 = vector.load %arg2[%c0, %c0_0] : memref<128x128xf32, #tpu.memory_space<vmem>>, vector<128x128xf32>
    %cst = arith.constant 0.000000e+00 : f32
    %1 = vector.broadcast %cst : f32 to vector<64x128xf32>
    %cst_1 = arith.constant 0.000000e+00 : f32
    %2 = vector.broadcast %cst_1 : f32 to vector<64x128xf32>
    %c0_2 = arith.constant 0 : index
    %c0_3 = arith.constant 0 : index
    %c0_4 = arith.constant 0 : index
    %3 = vector.load %arg1[%c0_2, %c0_3, %c0_4] : memref<6x64x128xf32, #tpu.memory_space<vmem>>, vector<1x64x128xf32>
    %4 = vector.shape_cast %3 : vector<1x64x128xf32> to vector<64x128xf32>
    %cst_5 = arith.constant dense<0.000000e+00> : vector<64x128xf32>
    %5 = tpu.matmul %1, %0, %cst_5 {dimension_numbers = #tpu.dot_dimension_numbers<[1], [0], [0], [1], [0, 0, 1, 1], [], []>} : vector<64x128xf32>, vector<128x128xf32>, vector<64x128xf32> -> vector<64x128xf32>
    %6 = arith.addf %4, %5 : vector<64x128xf32>
    %7 = arith.negf %6 : vector<64x128xf32>
    %8 = math.exp %7 : vector<64x128xf32>
    %cst_6 = arith.constant 1.000000e+00 : f32
    %9 = vector.broadcast %cst_6 : f32 to vector<64x128xf32>
    %10 = arith.addf %9, %8 : vector<64x128xf32>
    %11 = arith.divf %9, %10 : vector<64x128xf32>
    %12 = math.tanh %6 : vector<64x128xf32>
    %c96_i32 = arith.constant 96 : i32
    %13 = tpu.dynamic_rotate %11 by %c96_i32 dim 1 : vector<64x128xf32>, i32 -> vector<64x128xf32>
    %c64_i32 = arith.constant 64 : i32
    %14 = tpu.dynamic_rotate %12 by %c64_i32 dim 1 : vector<64x128xf32>, i32 -> vector<64x128xf32>
    %c32_i32 = arith.constant 32 : i32
    %15 = tpu.dynamic_rotate %11 by %c32_i32 dim 1 : vector<64x128xf32>, i32 -> vector<64x128xf32>
    %16 = arith.mulf %13, %2 : vector<64x128xf32>
    %17 = arith.mulf %11, %14 : vector<64x128xf32>
    %18 = arith.addf %16, %17 : vector<64x128xf32>
    %19 = math.tanh %18 : vector<64x128xf32>
    %20 = arith.mulf %15, %19 : vector<64x128xf32>
    %c1 = arith.constant 1 : index
    %c0_7 = arith.constant 0 : index
    %c0_8 = arith.constant 0 : index
    %21 = vector.load %arg1[%c1, %c0_7, %c0_8] : memref<6x64x128xf32, #tpu.memory_space<vmem>>, vector<1x64x128xf32>
    %22 = vector.shape_cast %21 : vector<1x64x128xf32> to vector<64x128xf32>
    %cst_9 = arith.constant dense<0.000000e+00> : vector<64x128xf32>
    %23 = tpu.matmul %20, %0, %cst_9 {dimension_numbers = #tpu.dot_dimension_numbers<[1], [0], [0], [1], [0, 0, 1, 1], [], []>} : vector<64x128xf32>, vector<128x128xf32>, vector<64x128xf32> -> vector<64x128xf32>
    %24 = arith.addf %22, %23 : vector<64x128xf32>
    %25 = arith.negf %24 : vector<64x128xf32>
    %26 = math.exp %25 : vector<64x128xf32>
    %cst_10 = arith.constant 1.000000e+00 : f32
    %27 = vector.broadcast %cst_10 : f32 to vector<64x128xf32>
    %28 = arith.addf %27, %26 : vector<64x128xf32>
    %29 = arith.divf %27, %28 : vector<64x128xf32>
    %30 = math.tanh %24 : vector<64x128xf32>
    %c96_i32_11 = arith.constant 96 : i32
    %31 = tpu.dynamic_rotate %29 by %c96_i32_11 dim 1 : vector<64x128xf32>, i32 -> vector<64x128xf32>
    %c64_i32_12 = arith.constant 64 : i32
    %32 = tpu.dynamic_rotate %30 by %c64_i32_12 dim 1 : vector<64x128xf32>, i32 -> vector<64x128xf32>
    %c32_i32_13 = arith.constant 32 : i32
    %33 = tpu.dynamic_rotate %29 by %c32_i32_13 dim 1 : vector<64x128xf32>, i32 -> vector<64x128xf32>
    %34 = arith.mulf %31, %18 : vector<64x128xf32>
    %35 = arith.mulf %29, %32 : vector<64x128xf32>
    %36 = arith.addf %34, %35 : vector<64x128xf32>
    %37 = math.tanh %36 : vector<64x128xf32>
    %38 = arith.mulf %33, %37 : vector<64x128xf32>
    %c2 = arith.constant 2 : index
    %c0_14 = arith.constant 0 : index
    %c0_15 = arith.constant 0 : index
    %39 = vector.load %arg1[%c2, %c0_14, %c0_15] : memref<6x64x128xf32, #tpu.memory_space<vmem>>, vector<1x64x128xf32>
    %40 = vector.shape_cast %39 : vector<1x64x128xf32> to vector<64x128xf32>
    %cst_16 = arith.constant dense<0.000000e+00> : vector<64x128xf32>
    %41 = tpu.matmul %38, %0, %cst_16 {dimension_numbers = #tpu.dot_dimension_numbers<[1], [0], [0], [1], [0, 0, 1, 1], [], []>} : vector<64x128xf32>, vector<128x128xf32>, vector<64x128xf32> -> vector<64x128xf32>
    %42 = arith.addf %40, %41 : vector<64x128xf32>
    %43 = arith.negf %42 : vector<64x128xf32>
    %44 = math.exp %43 : vector<64x128xf32>
    %cst_17 = arith.constant 1.000000e+00 : f32
    %45 = vector.broadcast %cst_17 : f32 to vector<64x128xf32>
    %46 = arith.addf %45, %44 : vector<64x128xf32>
    %47 = arith.divf %45, %46 : vector<64x128xf32>
    %48 = math.tanh %42 : vector<64x128xf32>
    %c96_i32_18 = arith.constant 96 : i32
    %49 = tpu.dynamic_rotate %47 by %c96_i32_18 dim 1 : vector<64x128xf32>, i32 -> vector<64x128xf32>
    %c64_i32_19 = arith.constant 64 : i32
    %50 = tpu.dynamic_rotate %48 by %c64_i32_19 dim 1 : vector<64x128xf32>, i32 -> vector<64x128xf32>
    %c32_i32_20 = arith.constant 32 : i32
    %51 = tpu.dynamic_rotate %47 by %c32_i32_20 dim 1 : vector<64x128xf32>, i32 -> vector<64x128xf32>
    %52 = arith.mulf %49, %36 : vector<64x128xf32>
    %53 = arith.mulf %47, %50 : vector<64x128xf32>
    %54 = arith.addf %52, %53 : vector<64x128xf32>
    %55 = math.tanh %54 : vector<64x128xf32>
    %56 = arith.mulf %51, %55 : vector<64x128xf32>
    %c3 = arith.constant 3 : index
    %c0_21 = arith.constant 0 : index
    %c0_22 = arith.constant 0 : index
    %57 = vector.load %arg1[%c3, %c0_21, %c0_22] : memref<6x64x128xf32, #tpu.memory_space<vmem>>, vector<1x64x128xf32>
    %58 = vector.shape_cast %57 : vector<1x64x128xf32> to vector<64x128xf32>
    %cst_23 = arith.constant dense<0.000000e+00> : vector<64x128xf32>
    %59 = tpu.matmul %56, %0, %cst_23 {dimension_numbers = #tpu.dot_dimension_numbers<[1], [0], [0], [1], [0, 0, 1, 1], [], []>} : vector<64x128xf32>, vector<128x128xf32>, vector<64x128xf32> -> vector<64x128xf32>
    %60 = arith.addf %58, %59 : vector<64x128xf32>
    %61 = arith.negf %60 : vector<64x128xf32>
    %62 = math.exp %61 : vector<64x128xf32>
    %cst_24 = arith.constant 1.000000e+00 : f32
    %63 = vector.broadcast %cst_24 : f32 to vector<64x128xf32>
    %64 = arith.addf %63, %62 : vector<64x128xf32>
    %65 = arith.divf %63, %64 : vector<64x128xf32>
    %66 = math.tanh %60 : vector<64x128xf32>
    %c96_i32_25 = arith.constant 96 : i32
    %67 = tpu.dynamic_rotate %65 by %c96_i32_25 dim 1 : vector<64x128xf32>, i32 -> vector<64x128xf32>
    %c64_i32_26 = arith.constant 64 : i32
    %68 = tpu.dynamic_rotate %66 by %c64_i32_26 dim 1 : vector<64x128xf32>, i32 -> vector<64x128xf32>
    %c32_i32_27 = arith.constant 32 : i32
    %69 = tpu.dynamic_rotate %65 by %c32_i32_27 dim 1 : vector<64x128xf32>, i32 -> vector<64x128xf32>
    %70 = arith.mulf %67, %54 : vector<64x128xf32>
    %71 = arith.mulf %65, %68 : vector<64x128xf32>
    %72 = arith.addf %70, %71 : vector<64x128xf32>
    %73 = math.tanh %72 : vector<64x128xf32>
    %74 = arith.mulf %69, %73 : vector<64x128xf32>
    %c4 = arith.constant 4 : index
    %c0_28 = arith.constant 0 : index
    %c0_29 = arith.constant 0 : index
    %75 = vector.load %arg1[%c4, %c0_28, %c0_29] : memref<6x64x128xf32, #tpu.memory_space<vmem>>, vector<1x64x128xf32>
    %76 = vector.shape_cast %75 : vector<1x64x128xf32> to vector<64x128xf32>
    %cst_30 = arith.constant dense<0.000000e+00> : vector<64x128xf32>
    %77 = tpu.matmul %74, %0, %cst_30 {dimension_numbers = #tpu.dot_dimension_numbers<[1], [0], [0], [1], [0, 0, 1, 1], [], []>} : vector<64x128xf32>, vector<128x128xf32>, vector<64x128xf32> -> vector<64x128xf32>
    %78 = arith.addf %76, %77 : vector<64x128xf32>
    %79 = arith.negf %78 : vector<64x128xf32>
    %80 = math.exp %79 : vector<64x128xf32>
    %cst_31 = arith.constant 1.000000e+00 : f32
    %81 = vector.broadcast %cst_31 : f32 to vector<64x128xf32>
    %82 = arith.addf %81, %80 : vector<64x128xf32>
    %83 = arith.divf %81, %82 : vector<64x128xf32>
    %84 = math.tanh %78 : vector<64x128xf32>
    %c96_i32_32 = arith.constant 96 : i32
    %85 = tpu.dynamic_rotate %83 by %c96_i32_32 dim 1 : vector<64x128xf32>, i32 -> vector<64x128xf32>
    %c64_i32_33 = arith.constant 64 : i32
    %86 = tpu.dynamic_rotate %84 by %c64_i32_33 dim 1 : vector<64x128xf32>, i32 -> vector<64x128xf32>
    %c32_i32_34 = arith.constant 32 : i32
    %87 = tpu.dynamic_rotate %83 by %c32_i32_34 dim 1 : vector<64x128xf32>, i32 -> vector<64x128xf32>
    %88 = arith.mulf %85, %72 : vector<64x128xf32>
    %89 = arith.mulf %83, %86 : vector<64x128xf32>
    %90 = arith.addf %88, %89 : vector<64x128xf32>
    %91 = math.tanh %90 : vector<64x128xf32>
    %92 = arith.mulf %87, %91 : vector<64x128xf32>
    %c5 = arith.constant 5 : index
    %c0_35 = arith.constant 0 : index
    %c0_36 = arith.constant 0 : index
    %93 = vector.load %arg1[%c5, %c0_35, %c0_36] : memref<6x64x128xf32, #tpu.memory_space<vmem>>, vector<1x64x128xf32>
    %94 = vector.shape_cast %93 : vector<1x64x128xf32> to vector<64x128xf32>
    %cst_37 = arith.constant dense<0.000000e+00> : vector<64x128xf32>
    %95 = tpu.matmul %92, %0, %cst_37 {dimension_numbers = #tpu.dot_dimension_numbers<[1], [0], [0], [1], [0, 0, 1, 1], [], []>} : vector<64x128xf32>, vector<128x128xf32>, vector<64x128xf32> -> vector<64x128xf32>
    %96 = arith.addf %94, %95 : vector<64x128xf32>
    %97 = arith.negf %96 : vector<64x128xf32>
    %98 = math.exp %97 : vector<64x128xf32>
    %cst_38 = arith.constant 1.000000e+00 : f32
    %99 = vector.broadcast %cst_38 : f32 to vector<64x128xf32>
    %100 = arith.addf %99, %98 : vector<64x128xf32>
    %101 = arith.divf %99, %100 : vector<64x128xf32>
    %102 = math.tanh %96 : vector<64x128xf32>
    %c96_i32_39 = arith.constant 96 : i32
    %103 = tpu.dynamic_rotate %101 by %c96_i32_39 dim 1 : vector<64x128xf32>, i32 -> vector<64x128xf32>
    %c64_i32_40 = arith.constant 64 : i32
    %104 = tpu.dynamic_rotate %102 by %c64_i32_40 dim 1 : vector<64x128xf32>, i32 -> vector<64x128xf32>
    %c32_i32_41 = arith.constant 32 : i32
    %105 = tpu.dynamic_rotate %101 by %c32_i32_41 dim 1 : vector<64x128xf32>, i32 -> vector<64x128xf32>
    %106 = arith.mulf %103, %90 : vector<64x128xf32>
    %107 = arith.mulf %101, %104 : vector<64x128xf32>
    %108 = arith.addf %106, %107 : vector<64x128xf32>
    %109 = math.tanh %108 : vector<64x128xf32>
    %110 = arith.mulf %105, %109 : vector<64x128xf32>
    %c0_42 = arith.constant 0 : index
    %c0_43 = arith.constant 0 : index
    %111 = vector.load %arg3[%c0_42, %c0_43] : memref<1x128xf32, #tpu.memory_space<vmem>>, vector<1x128xf32>
    %112 = vector.broadcast %111 : vector<1x128xf32> to vector<64x128xf32>
    %113 = arith.mulf %110, %112 : vector<64x128xf32>
    %cst_44 = arith.constant dense<0.000000e+00> : vector<64xf32>
    %114 = vector.multi_reduction <add>, %113, %cst_44 [1] : vector<64x128xf32> to vector<64xf32>
    %115 = vector.shape_cast %114 : vector<64xf32> to vector<64x1xf32>
    %c0_45 = arith.constant 0 : index
    %c0_46 = arith.constant 0 : index
    %116 = vector.load %arg4[%c0_45, %c0_46] : memref<1x1xf32, #tpu.memory_space<vmem>>, vector<1x1xf32>
    %117 = vector.broadcast %116 : vector<1x1xf32> to vector<64x1xf32>
    %118 = arith.addf %115, %117 : vector<64x1xf32>
    %119 = vector.shape_cast %118 : vector<64x1xf32> to vector<64x1xf32>
    %120 = vector.broadcast %119 : vector<64x1xf32> to vector<64x128xf32>
    %c0_47 = arith.constant 0 : index
    %c0_48 = arith.constant 0 : index
    %121 = vector.load %arg5[%c0_47, %c0_48] : memref<64x128xf32, #tpu.memory_space<vmem>>, vector<64x128xf32>
    tpu.vector_store %arg5[%c0_47, %c0_48], %120 {strides = array<i32>} : memref<64x128xf32, #tpu.memory_space<vmem>>, vector<64x128xf32>,
    return
  }
  func.func @transform_0(%arg0: i32) -> (i32, i32, i32) {
    %c0_i32 = arith.constant 0 : i32
    %c0_i32_0 = arith.constant 0 : i32
    %c0_i32_1 = arith.constant 0 : i32
    return %c0_i32, %arg0, %c0_i32_0 : i32, i32, i32
  }
  func.func @transform_1(%arg0: i32) -> (i32, i32) {
    %c0_i32 = arith.constant 0 : i32
    %c0_i32_0 = arith.constant 0 : i32
    %c0_i32_1 = arith.constant 0 : i32
    return %c0_i32, %c0_i32_0 : i32, i32
  }
  func.func @transform_2(%arg0: i32) -> (i32, i32) {
    %c0_i32 = arith.constant 0 : i32
    %c0_i32_0 = arith.constant 0 : i32
    %c0_i32_1 = arith.constant 0 : i32
    return %c0_i32, %c0_i32_0 : i32, i32
  }
  func.func @transform_3(%arg0: i32) -> (i32, i32) {
    %c0_i32 = arith.constant 0 : i32
    %c0_i32_0 = arith.constant 0 : i32
    %c0_i32_1 = arith.constant 0 : i32
    return %c0_i32, %c0_i32_0 : i32, i32
  }
  func.func @transform_4(%arg0: i32) -> (i32, i32) {
    %c0_i32 = arith.constant 0 : i32
    %c0_i32_0 = arith.constant 0 : i32
    return %arg0, %c0_i32 : i32, i32
  }
}

</mosaic_0001>

<llo_original>
// kernel: tpu_custom_call.1
$region0: #{tpu_custom_call.1}
  #allocation0 [shape = 'u32[]', space=smem, size = 0x4, offset = 0x4, fixed_abs, tag = 'smem constant byte address 0x4 - core index']
  #allocation1 [shape = 'u32[72,128]{1,0:T(1,128)}', space=vmem, size = 0x9000, scoped, tag = 'internal scratch']
  #allocation2 [shape = 'f32[1,1]{1,0:T(1,128)S(1)}', space=vmem, size = 0x200, scoped, tag = 'scoped memory for tpu_custom_call.1']
  %s0 = inlined_call_operand.hbm [shape: f32[6,64,128], index: 0, kind: input, shape index: {}]
  %s1 = inlined_call_operand.hbm [shape: f32[128,128], index: 1, kind: input, shape index: {}]
  %s2 = inlined_call_operand.vmem [shape: f32[1,128], index: 2, kind: input, shape index: {}]
  %s3 = inlined_call_operand.<no memory space> [shape: f32[1,1], index: 3, kind: input, shape index: {}]
  %s4 = inlined_call_operand.hbm [shape: f32[64,128], index: 4, kind: output, shape index: {}]
  %s5 = sld [smem:[#allocation0]]
  $region34: #{tpu_custom_call.1} parent=0
    _
  %s7 = ssub.s32 1, %s5
  %s8 = scalar_select 0, %s7, %s5
  %v9 = vstv %s3
  %10 = vst [vmem:[#allocation2] sm:$0x1] %v9
  $region1: #{tpu_custom_call.1} parent=0
    #allocation3 [shape = 'u8[196608]{0}', space=vmem, size = 0x30000, scoped, tag = 'input window, operand 0, single buffered']
    #allocation4 [shape = 's32[1]{0}', space=sflag, size = 0x4, scoped, tag = 'scoped memory for tpu_custom_call.1']
    #allocation5 [shape = 's32[1]{0}', space=sflag, size = 0x4, scoped, tag = 'scoped memory for tpu_custom_call.1']
    #allocation6 [shape = 'u8[65536]{0}', space=vmem, size = 0x10000, scoped, tag = 'input window, operand 1, single buffered']
    #allocation7 [shape = 's32[1]{0}', space=sflag, size = 0x4, scoped, tag = 'scoped memory for tpu_custom_call.1']
    #allocation8 [shape = 'u8[32768]{0}', space=vmem, size = 0x8000, scoped, tag = 'output window, operand 0, single buffered']
    %11 = vsyncpa [#allocation4], 0
    %12 = vsyncpa [#allocation7], 0
    %13 = vsyncpa [#allocation5], 0
    // Predicated region
    $region2: #{tpu_custom_call.1} parent=1 // pred_check
      _
    $region3: #{tpu_custom_call.1} parent=1 // pred_check_branch
      %15 = sbr.rel (0) target = $region5
    $region4: #{tpu_custom_call.1} parent=1 // pred_region
      %17 = vsyncadd [#allocation4], 0
      %s18 = sshll.u32 %s0, 4
      %s19 = int_to_ptr.hbm [resolvable:$true] %s18
      %s20 = sshll.u32 [#allocation3], 4
      %s21 = int_to_ptr.vmem [resolvable:$true] %s20
      %26 = dma.hbm_to_vmem [thread:$0]  %s19, 6144, %s21, [#allocation4], 128, 128, 8
    $region5: #{tpu_custom_call.1} parent=1 // pred_fallthru
      _
    // Predicated region
    $region6: #{tpu_custom_call.1} parent=1 // pred_check
      _
    $region7: #{tpu_custom_call.1} parent=1 // pred_check_branch
      %28 = sbr.rel (0) target = $region9
    $region8: #{tpu_custom_call.1} parent=1 // pred_region
      %30 = vsyncadd [#allocation7], 0
      %s31 = sshll.u32 %s1, 4
      %s32 = int_to_ptr.hbm [resolvable:$true] %s31
      %s33 = sshll.u32 [#allocation6], 4
      %s34 = int_to_ptr.vmem [resolvable:$true] %s33
      %39 = dma.hbm_to_vmem [thread:$0]  %s32, 2048, %s34, [#allocation7], 128, 128, 8
    $region9: #{tpu_custom_call.1} parent=1 // pred_fallthru
      _
    // Predicated region
    $region10: #{tpu_custom_call.1} parent=1 // pred_check
      _
    $region11: #{tpu_custom_call.1} parent=1 // pred_check_branch
      %41 = sbr.rel (0) target = $region13
    $region12: #{tpu_custom_call.1} parent=1 // pred_region
      _
    $region13: #{tpu_custom_call.1} parent=1 // pred_fallthru
      _
    // Predicated region
    $region14: #{tpu_custom_call.1} parent=1 // pred_check
      _
    $region15: #{tpu_custom_call.1} parent=1 // pred_check_branch
      %43 = sbr.rel (0) target = $region17
    $region16: #{tpu_custom_call.1} parent=1 // pred_region
      _
    $region17: #{tpu_custom_call.1} parent=1 // pred_fallthru
      _
    // Predicated region
    $region18: #{tpu_custom_call.1} parent=1 // pred_check
      _
    $region19: #{tpu_custom_call.1} parent=1 // pred_check_branch
      %45 = sbr.rel (0) target = $region21
    $region20: #{tpu_custom_call.1} parent=1 // pred_region
      %47 = dma.done [#allocation4], 6144
    $region21: #{tpu_custom_call.1} parent=1 // pred_fallthru
      _
    // Predicated region
    $region22: #{tpu_custom_call.1} parent=1 // pred_check
      _
    $region23: #{tpu_custom_call.1} parent=1 // pred_check_branch
      %49 = sbr.rel (0) target = $region25
    $region24: #{tpu_custom_call.1} parent=1 // pred_region
      %51 = dma.done [#allocation7], 2048
    $region25: #{tpu_custom_call.1} parent=1 // pred_fallthru
      _
    %v52 = vld [vmem:[#allocation6] sm:$0xff]
    %v53 = vld [vmem:[#allocation6 + $0x8] sm:$0xff]
    %v54 = vld [vmem:[#allocation6 + $0x10] sm:$0xff]
    %v55 = vld [vmem:[#allocation6 + $0x18] sm:$0xff]
    %v56 = vld [vmem:[#allocation6 + $0x20] sm:$0xff]
    %v57 = vld [vmem:[#allocation6 + $0x28] sm:$0xff]
    %v58 = vld [vmem:[#allocation6 + $0x30] sm:$0xff]
    %v59 = vld [vmem:[#allocation6 + $0x38] sm:$0xff]
    %v60 = vld [vmem:[#allocation6 + $0x40] sm:$0xff]
    %v61 = vld [vmem:[#allocation6 + $0x48] sm:$0xff]
    %v62 = vld [vmem:[#allocation6 + $0x50] sm:$0xff]
    %v63 = vld [vmem:[#allocation6 + $0x58] sm:$0xff]
    %v64 = vld [vmem:[#allocation6 + $0x60] sm:$0xff]
    %v65 = vld [vmem:[#allocation6 + $0x68] sm:$0xff]
    %v66 = vld [vmem:[#allocation6 + $0x70] sm:$0xff]
    %v67 = vld [vmem:[#allocation6 + $0x78] sm:$0xff]
    %v68 = vld [vmem:[#allocation3] sm:$0xff]
    %v69 = vld [vmem:[#allocation3 + $0x8] sm:$0xff]
    %v70 = vld [vmem:[#allocation3 + $0x10] sm:$0xff]
    %v71 = vld [vmem:[#allocation3 + $0x18] sm:$0xff]
    %v72 = vld [vmem:[#allocation3 + $0x20] sm:$0xff]
    %v73 = vld [vmem:[#allocation3 + $0x28] sm:$0xff]
    %v74 = vld [vmem:[#allocation3 + $0x30] sm:$0xff]
    %v75 = vld [vmem:[#allocation3 + $0x38] sm:$0xff]
    %76 = vmatpush.msra.mxu0 %v67
    %77 = vmatpush.msra.mxu0 %v66
    %78 = vmatpush.msra.mxu0 %v65
    %79 = vmatpush.msra.mxu0 %v64
    %80 = vmatpush.msra.mxu0 %v63
    %81 = vmatpush.msra.mxu0 %v62
    %82 = vmatpush.msra.mxu0 %v61
    %83 = vmatpush.msra.mxu0 %v60
    %84 = vmatpush.msra.mxu0 %v59
    %85 = vmatpush.msra.mxu0 %v58
    %86 = vmatpush.msra.mxu0 %v57
    %87 = vmatpush.msra.mxu0 %v56
    %88 = vmatpush.msra.mxu0 %v55
    %89 = vmatpush.msra.mxu0 %v54
    %90 = vmatpush.msra.mxu0 %v53
    %91 = vmatpush.msra.mxu0 %v52
    %92 = vmatmul.f32.gmra.mxu0 0.0
    %v93 = vpop.f32.mrf.mxu0
    %v94 = vadd.f32 0.0, %v93
    %95 = vmatmul.f32.gmra.mxu0 0.0
    %v96 = vpop.f32.mrf.mxu0
    %v97 = vadd.f32 0.0, %v96
    %98 = vmatmul.f32.gmra.mxu0 0.0
    %v99 = vpop.f32.mrf.mxu0
    %v100 = vadd.f32 0.0, %v99
    %101 = vmatmul.f32.gmra.mxu0 0.0
    %v102 = vpop.f32.mrf.mxu0
    %v103 = vadd.f32 0.0, %v102
    %104 = vmatmul.f32.gmra.mxu0 0.0
    %v105 = vpop.f32.mrf.mxu0
    %v106 = vadd.f32 0.0, %v105
    %107 = vmatmul.f32.gmra.mxu0 0.0
    %v108 = vpop.f32.mrf.mxu0
    %v109 = vadd.f32 0.0, %v108
    %110 = vmatmul.f32.gmra.mxu0 0.0
    %v111 = vpop.f32.mrf.mxu0
    %v112 = vadd.f32 0.0, %v111
    %113 = vmatmul.f32.gmra.mxu0 0.0
    %v114 = vpop.f32.mrf.mxu0
    %v115 = vadd.f32 0.0, %v114
    %116 = vdwg.mxu0
    %v117 = vadd.f32 %v68, %v94
    %v118 = vadd.f32 %v69, %v97
    %v119 = vadd.f32 %v70, %v100
    %v120 = vadd.f32 %v71, %v103
    %v121 = vadd.f32 %v72, %v106
    %v122 = vadd.f32 %v73, %v109
    %v123 = vadd.f32 %v74, %v112
    %v124 = vadd.f32 %v75, %v115
    %v125 = vxor.u32 %v117, 2147483648
    %v126 = vxor.u32 %v118, 2147483648
    %v127 = vxor.u32 %v119, 2147483648
    %v128 = vxor.u32 %v120, 2147483648
    %v129 = vxor.u32 %v121, 2147483648
    %v130 = vxor.u32 %v122, 2147483648
    %v131 = vxor.u32 %v123, 2147483648
    %v132 = vxor.u32 %v124, 2147483648
    %v133 = vmul.f32 %v125, 1.442695
    %v134 = vpow.pop %v133
    %v135 = vmul.f32 %v126, 1.442695
    %v136 = vpow.pop %v135
    %v137 = vmul.f32 %v127, 1.442695
    %v138 = vpow.pop %v137
    %v139 = vmul.f32 %v128, 1.442695
    %v140 = vpow.pop %v139
    %v141 = vmul.f32 %v129, 1.442695
    %v142 = vpow.pop %v141
    %v143 = vmul.f32 %v130, 1.442695
    %v144 = vpow.pop %v143
    %v145 = vmul.f32 %v131, 1.442695
    %v146 = vpow.pop %v145
    %v147 = vmul.f32 %v132, 1.442695
    %v148 = vpow.pop %v147
    %v149 = vadd.f32 %v134, 1.0
    %v150 = vadd.f32 %v136, 1.0
    %v151 = vadd.f32 %v138, 1.0
    %v152 = vadd.f32 %v140, 1.0
    %v153 = vadd.f32 %v142, 1.0
    %v154 = vadd.f32 %v144, 1.0
    %v155 = vadd.f32 %v146, 1.0
    %v156 = vadd.f32 %v148, 1.0
    %v157 = vrcp.pop %v149
    %v158 = vmul.f32 %v149, %v157
    %v159 = vsub.f32 1.0, %v158
    %v160 = vmul.f32 %v157, %v159
    %v161 = vadd.f32 %v157, %v160
    %vm162 = vweird.f32 %v149
    %vm163 = vweird.f32 %v157
    %vm164 = vmor %vm162, %vm163
    %v165 = vsel %vm164, %v157, %v161
    %v166 = vand.u32 2147483647, %v149
    %vm167 = vcmp.eq.f32.partialorder %v166, 8.507059e+37
    %v168 = vand.u32 %v149, 2147483648
    %v169 = vor.u32 1.1754944e-38, %v168
    %v170 = vsel %vm167, %v169, %v165
    %v171 = vmul.f32 1.0, %v170
    %v172 = vrcp.pop %v150
    %v173 = vmul.f32 %v150, %v172
    %v174 = vsub.f32 1.0, %v173
    %v175 = vmul.f32 %v172, %v174
    %v176 = vadd.f32 %v172, %v175
    %vm177 = vweird.f32 %v150
    %vm178 = vweird.f32 %v172
    %vm179 = vmor %vm177, %vm178
    %v180 = vsel %vm179, %v172, %v176
    %v181 = vand.u32 2147483647, %v150
    %vm182 = vcmp.eq.f32.partialorder %v181, 8.507059e+37
    %v183 = vand.u32 %v150, 2147483648
    %v184 = vor.u32 1.1754944e-38, %v183
    %v185 = vsel %vm182, %v184, %v180
    %v186 = vmul.f32 1.0, %v185
    %v187 = vrcp.pop %v151
    %v188 = vmul.f32 %v151, %v187
    %v189 = vsub.f32 1.0, %v188
    %v190 = vmul.f32 %v187, %v189
    %v191 = vadd.f32 %v187, %v190
    %vm192 = vweird.f32 %v151
    %vm193 = vweird.f32 %v187
    %vm194 = vmor %vm192, %vm193
    %v195 = vsel %vm194, %v187, %v191
    %v196 = vand.u32 2147483647, %v151
    %vm197 = vcmp.eq.f32.partialorder %v196, 8.507059e+37
    %v198 = vand.u32 %v151, 2147483648
    %v199 = vor.u32 1.1754944e-38, %v198
    %v200 = vsel %vm197, %v199, %v195
    %v201 = vmul.f32 1.0, %v200
    %v202 = vrcp.pop %v152
    %v203 = vmul.f32 %v152, %v202
    %v204 = vsub.f32 1.0, %v203
    %v205 = vmul.f32 %v202, %v204
    %v206 = vadd.f32 %v202, %v205
    %vm207 = vweird.f32 %v152
    %vm208 = vweird.f32 %v202
    %vm209 = vmor %vm207, %vm208
    %v210 = vsel %vm209, %v202, %v206
    %v211 = vand.u32 2147483647, %v152
    %vm212 = vcmp.eq.f32.partialorder %v211, 8.507059e+37
    %v213 = vand.u32 %v152, 2147483648
    %v214 = vor.u32 1.1754944e-38, %v213
    %v215 = vsel %vm212, %v214, %v210
    %v216 = vmul.f32 1.0, %v215
    %v217 = vrcp.pop %v153
    %v218 = vmul.f32 %v153, %v217
    %v219 = vsub.f32 1.0, %v218
    %v220 = vmul.f32 %v217, %v219
    %v221 = vadd.f32 %v217, %v220
    %vm222 = vweird.f32 %v153
    %vm223 = vweird.f32 %v217
    %vm224 = vmor %vm222, %vm223
    %v225 = vsel %vm224, %v217, %v221
    %v226 = vand.u32 2147483647, %v153
    %vm227 = vcmp.eq.f32.partialorder %v226, 8.507059e+37
    %v228 = vand.u32 %v153, 2147483648
    %v229 = vor.u32 1.1754944e-38, %v228
    %v230 = vsel %vm227, %v229, %v225
    %v231 = vmul.f32 1.0, %v230
    %v232 = vrcp.pop %v154
    %v233 = vmul.f32 %v154, %v232
    %v234 = vsub.f32 1.0, %v233
    %v235 = vmul.f32 %v232, %v234
    %v236 = vadd.f32 %v232, %v235
    %vm237 = vweird.f32 %v154
    %vm238 = vweird.f32 %v232
    %vm239 = vmor %vm237, %vm238
    %v240 = vsel %vm239, %v232, %v236
    %v241 = vand.u32 2147483647, %v154
    %vm242 = vcmp.eq.f32.partialorder %v241, 8.507059e+37
    %v243 = vand.u32 %v154, 2147483648
    %v244 = vor.u32 1.1754944e-38, %v243
    %v245 = vsel %vm242, %v244, %v240
    %v246 = vmul.f32 1.0, %v245
    %v247 = vrcp.pop %v155
    %v248 = vmul.f32 %v155, %v247
    %v249 = vsub.f32 1.0, %v248
    %v250 = vmul.f32 %v247, %v249
    %v251 = vadd.f32 %v247, %v250
    %vm252 = vweird.f32 %v155
    %vm253 = vweird.f32 %v247
    %vm254 = vmor %vm252, %vm253
    %v255 = vsel %vm254, %v247, %v251
    %v256 = vand.u32 2147483647, %v155
    %vm257 = vcmp.eq.f32.partialorder %v256, 8.507059e+37
    %v258 = vand.u32 %v155, 2147483648
    %v259 = vor.u32 1.1754944e-38, %v258
    %v260 = vsel %vm257, %v259, %v255
    %v261 = vmul.f32 1.0, %v260
    %v262 = vrcp.pop %v156
    %v263 = vmul.f32 %v156, %v262
    %v264 = vsub.f32 1.0, %v263
    %v265 = vmul.f32 %v262, %v264
    %v266 = vadd.f32 %v262, %v265
    %vm267 = vweird.f32 %v156
    %vm268 = vweird.f32 %v262
    %vm269 = vmor %vm267, %vm268
    %v270 = vsel %vm269, %v262, %v266
    %v271 = vand.u32 2147483647, %v156
    %vm272 = vcmp.eq.f32.partialorder %v271, 8.507059e+37
    %v273 = vand.u32 %v156, 2147483648
    %v274 = vor.u32 1.1754944e-38, %v273
    %v275 = vsel %vm272, %v274, %v270
    %v276 = vmul.f32 1.0, %v275
    %v277 = vtanh.pop %v117
    %v278 = vtanh.pop %v118
    %v279 = vtanh.pop %v119
    %v280 = vtanh.pop %v120
    %v281 = vtanh.pop %v121
    %v282 = vtanh.pop %v122
    %v283 = vtanh.pop %v123
    %v284 = vtanh.pop %v124
    %285 = vrot.lane.b32.xlu0 %v171, 96
    %v286 = vpop.permute.xlu0 %285
    %287 = vrot.lane.b32.xlu0 %v186, 96
    %v288 = vpop.permute.xlu0 %287
    %289 = vrot.lane.b32.xlu0 %v201, 96
    %v290 = vpop.permute.xlu0 %289
    %291 = vrot.lane.b32.xlu0 %v216, 96
    %v292 = vpop.permute.xlu0 %291
    %293 = vrot.lane.b32.xlu0 %v231, 96
    %v294 = vpop.permute.xlu0 %293
    %295 = vrot.lane.b32.xlu0 %v246, 96
    %v296 = vpop.permute.xlu0 %295
    %297 = vrot.lane.b32.xlu0 %v261, 96
    %v298 = vpop.permute.xlu0 %297
    %299 = vrot.lane.b32.xlu0 %v276, 96
    %v300 = vpop.permute.xlu0 %299
    %301 = vrot.lane.b32.xlu0 %v277, 64
    %v302 = vpop.permute.xlu0 %301
    %303 = vrot.lane.b32.xlu0 %v278, 64
    %v304 = vpop.permute.xlu0 %303
    %305 = vrot.lane.b32.xlu0 %v279, 64
    %v306 = vpop.permute.xlu0 %305
    %307 = vrot.lane.b32.xlu0 %v280, 64
    %v308 = vpop.permute.xlu0 %307
    %309 = vrot.lane.b32.xlu0 %v281, 64
    %v310 = vpop.permute.xlu0 %309
    %311 = vrot.lane.b32.xlu0 %v282, 64
    %v312 = vpop.permute.xlu0 %311
    %313 = vrot.lane.b32.xlu0 %v283, 64
    %v314 = vpop.permute.xlu0 %313
    %315 = vrot.lane.b32.xlu0 %v284, 64
    %v316 = vpop.permute.xlu0 %315
    %317 = vrot.lane.b32.xlu0 %v171, 32
    %v318 = vpop.permute.xlu0 %317
    %319 = vrot.lane.b32.xlu0 %v186, 32
    %v320 = vpop.permute.xlu0 %319
    %321 = vrot.lane.b32.xlu0 %v201, 32
    %v322 = vpop.permute.xlu0 %321
    %323 = vrot.lane.b32.xlu0 %v216, 32
    %v324 = vpop.permute.xlu0 %323
    %325 = vrot.lane.b32.xlu0 %v231, 32
    %v326 = vpop.permute.xlu0 %325
    %327 = vrot.lane.b32.xlu0 %v246, 32
    %v328 = vpop.permute.xlu0 %327
    %329 = vrot.lane.b32.xlu0 %v261, 32
    %v330 = vpop.permute.xlu0 %329
    %331 = vrot.lane.b32.xlu0 %v276, 32
    %v332 = vpop.permute.xlu0 %331
    %v333 = vmul.f32 %v286, 0.0
    %v334 = vmul.f32 %v288, 0.0
    %v335 = vmul.f32 %v290, 0.0
    %v336 = vmul.f32 %v292, 0.0
    %v337 = vmul.f32 %v294, 0.0
    %v338 = vmul.f32 %v296, 0.0
    %v339 = vmul.f32 %v298, 0.0
    %v340 = vmul.f32 %v300, 0.0
    %v341 = vmul.f32 %v171, %v302
    %v342 = vmul.f32 %v186, %v304
    %v343 = vmul.f32 %v201, %v306
    %v344 = vmul.f32 %v216, %v308
    %v345 = vmul.f32 %v231, %v310
    %v346 = vmul.f32 %v246, %v312
    %v347 = vmul.f32 %v261, %v314
    %v348 = vmul.f32 %v276, %v316
    %v349 = vadd.f32 %v333, %v341
    %v350 = vadd.f32 %v334, %v342
    %v351 = vadd.f32 %v335, %v343
    %v352 = vadd.f32 %v336, %v344
    %v353 = vadd.f32 %v337, %v345
    %v354 = vadd.f32 %v338, %v346
    %v355 = vadd.f32 %v339, %v347
    %v356 = vadd.f32 %v340, %v348
    %v357 = vtanh.pop %v349
    %v358 = vtanh.pop %v350
    %v359 = vtanh.pop %v351
    %v360 = vtanh.pop %v352
    %v361 = vtanh.pop %v353
    %v362 = vtanh.pop %v354
    %v363 = vtanh.pop %v355
    %v364 = vtanh.pop %v356
    %v365 = vmul.f32 %v318, %v357
    %v366 = vmul.f32 %v320, %v358
    %v367 = vmul.f32 %v322, %v359
    %v368 = vmul.f32 %v324, %v360
    %v369 = vmul.f32 %v326, %v361
    %v370 = vmul.f32 %v328, %v362
    %v371 = vmul.f32 %v330, %v363
    %v372 = vmul.f32 %v332, %v364
    %s373 = scalar_lea.vmem [#allocation3], 64
    %v374 = vld [vmem:[%s373] sm:$0xff]
    %v375 = vld [vmem:[%s373 + $0x8] sm:$0xff]
    %v376 = vld [vmem:[%s373 + $0x10] sm:$0xff]
    %v377 = vld [vmem:[%s373 + $0x18] sm:$0xff]
    %v378 = vld [vmem:[%s373 + $0x20] sm:$0xff]
    %v379 = vld [vmem:[%s373 + $0x28] sm:$0xff]
    %v380 = vld [vmem:[%s373 + $0x30] sm:$0xff]
    %v381 = vld [vmem:[%s373 + $0x38] sm:$0xff]
    %382 = vmatpush.msra.mxu0 %v67
    %383 = vmatpush.msra.mxu0 %v66
    %384 = vmatpush.msra.mxu0 %v65
    %385 = vmatpush.msra.mxu0 %v64
    %386 = vmatpush.msra.mxu0 %v63
    %387 = vmatpush.msra.mxu0 %v62
    %388 = vmatpush.msra.mxu0 %v61
    %389 = vmatpush.msra.mxu0 %v60
    %390 = vmatpush.msra.mxu0 %v59
    %391 = vmatpush.msra.mxu0 %v58
    %392 = vmatpush.msra.mxu0 %v57
    %393 = vmatpush.msra.mxu0 %v56
    %394 = vmatpush.msra.mxu0 %v55
    %395 = vmatpush.msra.mxu0 %v54
    %396 = vmatpush.msra.mxu0 %v53
    %397 = vmatpush.msra.mxu0 %v52
    %398 = vmatmul.f32.gmra.mxu0 %v365
    %v399 = vpop.f32.mrf.mxu0
    %v400 = vadd.f32 0.0, %v399
    %401 = vmatmul.f32.gmra.mxu0 %v366
    %v402 = vpop.f32.mrf.mxu0
    %v403 = vadd.f32 0.0, %v402
    %404 = vmatmul.f32.gmra.mxu0 %v367
    %v405 = vpop.f32.mrf.mxu0
    %v406 = vadd.f32 0.0, %v405
    %407 = vmatmul.f32.gmra.mxu0 %v368
    %v408 = vpop.f32.mrf.mxu0
    %v409 = vadd.f32 0.0, %v408
    %410 = vmatmul.f32.gmra.mxu0 %v369
    %v411 = vpop.f32.mrf.mxu0
    %v412 = vadd.f32 0.0, %v411
    %413 = vmatmul.f32.gmra.mxu0 %v370
    %v414 = vpop.f32.mrf.mxu0
    %v415 = vadd.f32 0.0, %v414
    %416 = vmatmul.f32.gmra.mxu0 %v371
    %v417 = vpop.f32.mrf.mxu0
    %v418 = vadd.f32 0.0, %v417
    %419 = vmatmul.f32.gmra.mxu0 %v372
    %v420 = vpop.f32.mrf.mxu0
    %v421 = vadd.f32 0.0, %v420
    %422 = vdwg.mxu0
    %v423 = vadd.f32 %v374, %v400
    %v424 = vadd.f32 %v375, %v403
    %v425 = vadd.f32 %v376, %v406
    %v426 = vadd.f32 %v377, %v409
    %v427 = vadd.f32 %v378, %v412
    %v428 = vadd.f32 %v379, %v415
    %v429 = vadd.f32 %v380, %v418
    %v430 = vadd.f32 %v381, %v421
    %v431 = vxor.u32 %v423, 2147483648
    %v432 = vxor.u32 %v424, 2147483648
    %v433 = vxor.u32 %v425, 2147483648
    %v434 = vxor.u32 %v426, 2147483648
    %v435 = vxor.u32 %v427, 2147483648
    %v436 = vxor.u32 %v428, 2147483648
    %v437 = vxor.u32 %v429, 2147483648
    %v438 = vxor.u32 %v430, 2147483648
    %v439 = vmul.f32 %v431, 1.442695
    %v440 = vpow.pop %v439
    %v441 = vmul.f32 %v432, 1.442695
    %v442 = vpow.pop %v441
    %v443 = vmul.f32 %v433, 1.442695
    %v444 = vpow.pop %v443
    %v445 = vmul.f32 %v434, 1.442695
    %v446 = vpow.pop %v445
    %v447 = vmul.f32 %v435, 1.442695
    %v448 = vpow.pop %v447
    %v449 = vmul.f32 %v436, 1.442695
    %v450 = vpow.pop %v449
    %v451 = vmul.f32 %v437, 1.442695
    %v452 = vpow.pop %v451
    %v453 = vmul.f32 %v438, 1.442695
    %v454 = vpow.pop %v453
    %v455 = vadd.f32 %v440, 1.0
    %v456 = vadd.f32 %v442, 1.0
    %v457 = vadd.f32 %v444, 1.0
    %v458 = vadd.f32 %v446, 1.0
    %v459 = vadd.f32 %v448, 1.0
    %v460 = vadd.f32 %v450, 1.0
    %v461 = vadd.f32 %v452, 1.0
    %v462 = vadd.f32 %v454, 1.0
    %v463 = vrcp.pop %v455
    %v464 = vmul.f32 %v455, %v463
    %v465 = vsub.f32 1.0, %v464
    %v466 = vmul.f32 %v463, %v465
    %v467 = vadd.f32 %v463, %v466
    %vm468 = vweird.f32 %v455
    %vm469 = vweird.f32 %v463
    %vm470 = vmor %vm468, %vm469
    %v471 = vsel %vm470, %v463, %v467
    %v472 = vand.u32 2147483647, %v455
    %vm473 = vcmp.eq.f32.partialorder %v472, 8.507059e+37
    %v474 = vand.u32 %v455, 2147483648
    %v475 = vor.u32 1.1754944e-38, %v474
    %v476 = vsel %vm473, %v475, %v471
    %v477 = vmul.f32 1.0, %v476
    %v478 = vrcp.pop %v456
    %v479 = vmul.f32 %v456, %v478
    %v480 = vsub.f32 1.0, %v479
    %v481 = vmul.f32 %v478, %v480
    %v482 = vadd.f32 %v478, %v481
    %vm483 = vweird.f32 %v456
    %vm484 = vweird.f32 %v478
    %vm485 = vmor %vm483, %vm484
    %v486 = vsel %vm485, %v478, %v482
    %v487 = vand.u32 2147483647, %v456
    %vm488 = vcmp.eq.f32.partialorder %v487, 8.507059e+37
    %v489 = vand.u32 %v456, 2147483648
    %v490 = vor.u32 1.1754944e-38, %v489
    %v491 = vsel %vm488, %v490, %v486
    %v492 = vmul.f32 1.0, %v491
    %v493 = vrcp.pop %v457
    %v494 = vmul.f32 %v457, %v493
    %v495 = vsub.f32 1.0, %v494
    %v496 = vmul.f32 %v493, %v495
    %v497 = vadd.f32 %v493, %v496
    %vm498 = vweird.f32 %v457
    %vm499 = vweird.f32 %v493
    %vm500 = vmor %vm498, %vm499
    %v501 = vsel %vm500, %v493, %v497
    %v502 = vand.u32 2147483647, %v457
    %vm503 = vcmp.eq.f32.partialorder %v502, 8.507059e+37
    %v504 = vand.u32 %v457, 2147483648
    %v505 = vor.u32 1.1754944e-38, %v504
    %v506 = vsel %vm503, %v505, %v501
    %v507 = vmul.f32 1.0, %v506
    %v508 = vrcp.pop %v458
    %v509 = vmul.f32 %v458, %v508
    %v510 = vsub.f32 1.0, %v509
    %v511 = vmul.f32 %v508, %v510
    %v512 = vadd.f32 %v508, %v511
    %vm513 = vweird.f32 %v458
    %vm514 = vweird.f32 %v508
    %vm515 = vmor %vm513, %vm514
    %v516 = vsel %vm515, %v508, %v512
    %v517 = vand.u32 2147483647, %v458
    %vm518 = vcmp.eq.f32.partialorder %v517, 8.507059e+37
    %v519 = vand.u32 %v458, 2147483648
    %v520 = vor.u32 1.1754944e-38, %v519
    %v521 = vsel %vm518, %v520, %v516
    %v522 = vmul.f32 1.0, %v521
    %v523 = vrcp.pop %v459
    %v524 = vmul.f32 %v459, %v523
    %v525 = vsub.f32 1.0, %v524
    %v526 = vmul.f32 %v523, %v525
    %v527 = vadd.f32 %v523, %v526
    %vm528 = vweird.f32 %v459
    %vm529 = vweird.f32 %v523
    %vm530 = vmor %vm528, %vm529
    %v531 = vsel %vm530, %v523, %v527
    %v532 = vand.u32 2147483647, %v459
    %vm533 = vcmp.eq.f32.partialorder %v532, 8.507059e+37
    %v534 = vand.u32 %v459, 2147483648
    %v535 = vor.u32 1.1754944e-38, %v534
    %v536 = vsel %vm533, %v535, %v531
    %v537 = vmul.f32 1.0, %v536
    %v538 = vrcp.pop %v460
    %v539 = vmul.f32 %v460, %v538
    %v540 = vsub.f32 1.0, %v539
    %v541 = vmul.f32 %v538, %v540
    %v542 = vadd.f32 %v538, %v541
    %vm543 = vweird.f32 %v460
    %vm544 = vweird.f32 %v538
    %vm545 = vmor %vm543, %vm544
    %v546 = vsel %vm545, %v538, %v542
    %v547 = vand.u32 2147483647, %v460
    %vm548 = vcmp.eq.f32.partialorder %v547, 8.507059e+37
    %v549 = vand.u32 %v460, 2147483648
    %v550 = vor.u32 1.1754944e-38, %v549
    %v551 = vsel %vm548, %v550, %v546
    %v552 = vmul.f32 1.0, %v551
    %v553 = vrcp.pop %v461
    %v554 = vmul.f32 %v461, %v553
    %v555 = vsub.f32 1.0, %v554
    %v556 = vmul.f32 %v553, %v555
    %v557 = vadd.f32 %v553, %v556
    %vm558 = vweird.f32 %v461
    %vm559 = vweird.f32 %v553
    %vm560 = vmor %vm558, %vm559
    %v561 = vsel %vm560, %v553, %v557
    %v562 = vand.u32 2147483647, %v461
    %vm563 = vcmp.eq.f32.partialorder %v562, 8.507059e+37
    %v564 = vand.u32 %v461, 2147483648
    %v565 = vor.u32 1.1754944e-38, %v564
    %v566 = vsel %vm563, %v565, %v561
    %v567 = vmul.f32 1.0, %v566
    %v568 = vrcp.pop %v462
    %v569 = vmul.f32 %v462, %v568
    %v570 = vsub.f32 1.0, %v569
    %v571 = vmul.f32 %v568, %v570
    %v572 = vadd.f32 %v568, %v571
    %vm573 = vweird.f32 %v462
    %vm574 = vweird.f32 %v568
    %vm575 = vmor %vm573, %vm574
    %v576 = vsel %vm575, %v568, %v572
    %v577 = vand.u32 2147483647, %v462
    %vm578 = vcmp.eq.f32.partialorder %v577, 8.507059e+37
    %v579 = vand.u32 %v462, 2147483648
    %v580 = vor.u32 1.1754944e-38, %v579
    %v581 = vsel %vm578, %v580, %v576
    %v582 = vmul.f32 1.0, %v581
    %v583 = vtanh.pop %v423
    %v584 = vtanh.pop %v424
    %v585 = vtanh.pop %v425
    %v586 = vtanh.pop %v426
    %v587 = vtanh.pop %v427
    %v588 = vtanh.pop %v428
    %v589 = vtanh.pop %v429
    %v590 = vtanh.pop %v430
    %591 = vrot.lane.b32.xlu0 %v477, 96
    %v592 = vpop.permute.xlu0 %591
    %593 = vrot.lane.b32.xlu0 %v492, 96
    %v594 = vpop.permute.xlu0 %593
    %595 = vrot.lane.b32.xlu0 %v507, 96
    %v596 = vpop.permute.xlu0 %595
    %597 = vrot.lane.b32.xlu0 %v522, 96
    %v598 = vpop.permute.xlu0 %597
    %599 = vrot.lane.b32.xlu0 %v537, 96
    %v600 = vpop.permute.xlu0 %599
    %601 = vrot.lane.b32.xlu0 %v552, 96
    %v602 = vpop.permute.xlu0 %601
    %603 = vrot.lane.b32.xlu0 %v567, 96
    %v604 = vpop.permute.xlu0 %603
    %605 = vrot.lane.b32.xlu0 %v582, 96
    %v606 = vpop.permute.xlu0 %605
    %607 = vrot.lane.b32.xlu0 %v583, 64
    %v608 = vpop.permute.xlu0 %607
    %609 = vrot.lane.b32.xlu0 %v584, 64
    %v610 = vpop.permute.xlu0 %609
    %611 = vrot.lane.b32.xlu0 %v585, 64
    %v612 = vpop.permute.xlu0 %611
    %613 = vrot.lane.b32.xlu0 %v586, 64
    %v614 = vpop.permute.xlu0 %613
    %615 = vrot.lane.b32.xlu0 %v587, 64
    %v616 = vpop.permute.xlu0 %615
    %617 = vrot.lane.b32.xlu0 %v588, 64
    %v618 = vpop.permute.xlu0 %617
    %619 = vrot.lane.b32.xlu0 %v589, 64
    %v620 = vpop.permute.xlu0 %619
    %621 = vrot.lane.b32.xlu0 %v590, 64
    %v622 = vpop.permute.xlu0 %621
    %623 = vrot.lane.b32.xlu0 %v477, 32
    %v624 = vpop.permute.xlu0 %623
    %625 = vrot.lane.b32.xlu0 %v492, 32
    %v626 = vpop.permute.xlu0 %625
    %627 = vrot.lane.b32.xlu0 %v507, 32
    %v628 = vpop.permute.xlu0 %627
    %629 = vrot.lane.b32.xlu0 %v522, 32
    %v630 = vpop.permute.xlu0 %629
    %631 = vrot.lane.b32.xlu0 %v537, 32
    %v632 = vpop.permute.xlu0 %631
    %633 = vrot.lane.b32.xlu0 %v552, 32
    %v634 = vpop.permute.xlu0 %633
    %635 = vrot.lane.b32.xlu0 %v567, 32
    %v636 = vpop.permute.xlu0 %635
    %637 = vrot.lane.b32.xlu0 %v582, 32
    %v638 = vpop.permute.xlu0 %637
    %v639 = vmul.f32 %v592, %v349
    %v640 = vmul.f32 %v594, %v350
    %v641 = vmul.f32 %v596, %v351
    %v642 = vmul.f32 %v598, %v352
    %v643 = vmul.f32 %v600, %v353
    %v644 = vmul.f32 %v602, %v354
    %v645 = vmul.f32 %v604, %v355
    %v646 = vmul.f32 %v606, %v356
    %v647 = vmul.f32 %v477, %v608
    %v648 = vmul.f32 %v492, %v610
    %v649 = vmul.f32 %v507, %v612
    %v650 = vmul.f32 %v522, %v614
    %v651 = vmul.f32 %v537, %v616
    %v652 = vmul.f32 %v552, %v618
    %v653 = vmul.f32 %v567, %v620
    %v654 = vmul.f32 %v582, %v622
    %v655 = vadd.f32 %v639, %v647
    %v656 = vadd.f32 %v640, %v648
    %v657 = vadd.f32 %v641, %v649
    %v658 = vadd.f32 %v642, %v650
    %v659 = vadd.f32 %v643, %v651
    %v660 = vadd.f32 %v644, %v652
    %v661 = vadd.f32 %v645, %v653
    %v662 = vadd.f32 %v646, %v654
    %v663 = vtanh.pop %v655
    %v664 = vtanh.pop %v656
    %v665 = vtanh.pop %v657
    %v666 = vtanh.pop %v658
    %v667 = vtanh.pop %v659
    %v668 = vtanh.pop %v660
    %v669 = vtanh.pop %v661
    %v670 = vtanh.pop %v662
    %v671 = vmul.f32 %v624, %v663
    %v672 = vmul.f32 %v626, %v664
    %v673 = vmul.f32 %v628, %v665
    %v674 = vmul.f32 %v630, %v666
    %v675 = vmul.f32 %v632, %v667
    %v676 = vmul.f32 %v634, %v668
    %v677 = vmul.f32 %v636, %v669
    %v678 = vmul.f32 %v638, %v670
    %s679 = scalar_lea.vmem [#allocation3], 128
    %v680 = vld [vmem:[%s679] sm:$0xff]
    %v681 = vld [vmem:[%s679 + $0x8] sm:$0xff]
    %v682 = vld [vmem:[%s679 + $0x10] sm:$0xff]
    %v683 = vld [vmem:[%s679 + $0x18] sm:$0xff]
    %v684 = vld [vmem:[%s679 + $0x20] sm:$0xff]
    %v685 = vld [vmem:[%s679 + $0x28] sm:$0xff]
    %v686 = vld [vmem:[%s679 + $0x30] sm:$0xff]
    %v687 = vld [vmem:[%s679 + $0x38] sm:$0xff]
    %688 = vmatpush.msra.mxu0 %v67
    %689 = vmatpush.msra.mxu0 %v66
    %690 = vmatpush.msra.mxu0 %v65
    %691 = vmatpush.msra.mxu0 %v64
    %692 = vmatpush.msra.mxu0 %v63
    %693 = vmatpush.msra.mxu0 %v62
    %694 = vmatpush.msra.mxu0 %v61
    %695 = vmatpush.msra.mxu0 %v60
    %696 = vmatpush.msra.mxu0 %v59
    %697 = vmatpush.msra.mxu0 %v58
    %698 = vmatpush.msra.mxu0 %v57
    %699 = vmatpush.msra.mxu0 %v56
    %700 = vmatpush.msra.mxu0 %v55
    %701 = vmatpush.msra.mxu0 %v54
    %702 = vmatpush.msra.mxu0 %v53
    %703 = vmatpush.msra.mxu0 %v52
    %704 = vmatmul.f32.gmra.mxu0 %v671
    %v705 = vpop.f32.mrf.mxu0
    %v706 = vadd.f32 0.0, %v705
    %707 = vmatmul.f32.gmra.mxu0 %v672
    %v708 = vpop.f32.mrf.mxu0
    %v709 = vadd.f32 0.0, %v708
    %710 = vmatmul.f32.gmra.mxu0 %v673
    %v711 = vpop.f32.mrf.mxu0
    %v712 = vadd.f32 0.0, %v711
    %713 = vmatmul.f32.gmra.mxu0 %v674
    %v714 = vpop.f32.mrf.mxu0
    %v715 = vadd.f32 0.0, %v714
    %716 = vmatmul.f32.gmra.mxu0 %v675
    %v717 = vpop.f32.mrf.mxu0
    %v718 = vadd.f32 0.0, %v717
    %719 = vmatmul.f32.gmra.mxu0 %v676
    %v720 = vpop.f32.mrf.mxu0
    %v721 = vadd.f32 0.0, %v720
    %722 = vmatmul.f32.gmra.mxu0 %v677
    %v723 = vpop.f32.mrf.mxu0
    %v724 = vadd.f32 0.0, %v723
    %725 = vmatmul.f32.gmra.mxu0 %v678
    %v726 = vpop.f32.mrf.mxu0
    %v727 = vadd.f32 0.0, %v726
    %728 = vdwg.mxu0
    %v729 = vadd.f32 %v680, %v706
    %v730 = vadd.f32 %v681, %v709
    %v731 = vadd.f32 %v682, %v712
    %v732 = vadd.f32 %v683, %v715
    %v733 = vadd.f32 %v684, %v718
    %v734 = vadd.f32 %v685, %v721
    %v735 = vadd.f32 %v686, %v724
    %v736 = vadd.f32 %v687, %v727
    %v737 = vxor.u32 %v729, 2147483648
    %v738 = vxor.u32 %v730, 2147483648
    %v739 = vxor.u32 %v731, 2147483648
    %v740 = vxor.u32 %v732, 2147483648
    %v741 = vxor.u32 %v733, 2147483648
    %v742 = vxor.u32 %v734, 2147483648
    %v743 = vxor.u32 %v735, 2147483648
    %v744 = vxor.u32 %v736, 2147483648
    %v745 = vmul.f32 %v737, 1.442695
    %v746 = vpow.pop %v745
    %v747 = vmul.f32 %v738, 1.442695
    %v748 = vpow.pop %v747
    %v749 = vmul.f32 %v739, 1.442695
    %v750 = vpow.pop %v749
    %v751 = vmul.f32 %v740, 1.442695
    %v752 = vpow.pop %v751
    %v753 = vmul.f32 %v741, 1.442695
    %v754 = vpow.pop %v753
    %v755 = vmul.f32 %v742, 1.442695
    %v756 = vpow.pop %v755
    %v757 = vmul.f32 %v743, 1.442695
    %v758 = vpow.pop %v757
    %v759 = vmul.f32 %v744, 1.442695
    %v760 = vpow.pop %v759
    %v761 = vadd.f32 %v746, 1.0
    %v762 = vadd.f32 %v748, 1.0
    %v763 = vadd.f32 %v750, 1.0
    %v764 = vadd.f32 %v752, 1.0
    %v765 = vadd.f32 %v754, 1.0
    %v766 = vadd.f32 %v756, 1.0
    %v767 = vadd.f32 %v758, 1.0
    %v768 = vadd.f32 %v760, 1.0
    %v769 = vrcp.pop %v761
    %v770 = vmul.f32 %v761, %v769
    %v771 = vsub.f32 1.0, %v770
    %v772 = vmul.f32 %v769, %v771
    %v773 = vadd.f32 %v769, %v772
    %vm774 = vweird.f32 %v761
    %vm775 = vweird.f32 %v769
    %vm776 = vmor %vm774, %vm775
    %v777 = vsel %vm776, %v769, %v773
    %v778 = vand.u32 2147483647, %v761
    %vm779 = vcmp.eq.f32.partialorder %v778, 8.507059e+37
    %v780 = vand.u32 %v761, 2147483648
    %v781 = vor.u32 1.1754944e-38, %v780
    %v782 = vsel %vm779, %v781, %v777
    %v783 = vmul.f32 1.0, %v782
    %v784 = vrcp.pop %v762
    %v785 = vmul.f32 %v762, %v784
    %v786 = vsub.f32 1.0, %v785
    %v787 = vmul.f32 %v784, %v786
    %v788 = vadd.f32 %v784, %v787
    %vm789 = vweird.f32 %v762
    %vm790 = vweird.f32 %v784
    %vm791 = vmor %vm789, %vm790
    %v792 = vsel %vm791, %v784, %v788
    %v793 = vand.u32 2147483647, %v762
    %vm794 = vcmp.eq.f32.partialorder %v793, 8.507059e+37
    %v795 = vand.u32 %v762, 2147483648
    %v796 = vor.u32 1.1754944e-38, %v795
    %v797 = vsel %vm794, %v796, %v792
    %v798 = vmul.f32 1.0, %v797
    %v799 = vrcp.pop %v763
    %v800 = vmul.f32 %v763, %v799
    %v801 = vsub.f32 1.0, %v800
    %v802 = vmul.f32 %v799, %v801
    %v803 = vadd.f32 %v799, %v802
    %vm804 = vweird.f32 %v763
    %vm805 = vweird.f32 %v799
    %vm806 = vmor %vm804, %vm805
    %v807 = vsel %vm806, %v799, %v803
    %v808 = vand.u32 2147483647, %v763
    %vm809 = vcmp.eq.f32.partialorder %v808, 8.507059e+37
    %v810 = vand.u32 %v763, 2147483648
    %v811 = vor.u32 1.1754944e-38, %v810
    %v812 = vsel %vm809, %v811, %v807
    %v813 = vmul.f32 1.0, %v812
    %v814 = vrcp.pop %v764
    %v815 = vmul.f32 %v764, %v814
    %v816 = vsub.f32 1.0, %v815
    %v817 = vmul.f32 %v814, %v816
    %v818 = vadd.f32 %v814, %v817
    %vm819 = vweird.f32 %v764
    %vm820 = vweird.f32 %v814
    %vm821 = vmor %vm819, %vm820
    %v822 = vsel %vm821, %v814, %v818
    %v823 = vand.u32 2147483647, %v764
    %vm824 = vcmp.eq.f32.partialorder %v823, 8.507059e+37
    %v825 = vand.u32 %v764, 2147483648
    %v826 = vor.u32 1.1754944e-38, %v825
    %v827 = vsel %vm824, %v826, %v822
    %v828 = vmul.f32 1.0, %v827
    %v829 = vrcp.pop %v765
    %v830 = vmul.f32 %v765, %v829
    %v831 = vsub.f32 1.0, %v830
    %v832 = vmul.f32 %v829, %v831
    %v833 = vadd.f32 %v829, %v832
    %vm834 = vweird.f32 %v765
    %vm835 = vweird.f32 %v829
    %vm836 = vmor %vm834, %vm835
    %v837 = vsel %vm836, %v829, %v833
    %v838 = vand.u32 2147483647, %v765
    %vm839 = vcmp.eq.f32.partialorder %v838, 8.507059e+37
    %v840 = vand.u32 %v765, 2147483648
    %v841 = vor.u32 1.1754944e-38, %v840
    %v842 = vsel %vm839, %v841, %v837
    %v843 = vmul.f32 1.0, %v842
    %v844 = vrcp.pop %v766
    %v845 = vmul.f32 %v766, %v844
    %v846 = vsub.f32 1.0, %v845
    %v847 = vmul.f32 %v844, %v846
    %v848 = vadd.f32 %v844, %v847
    %vm849 = vweird.f32 %v766
    %vm850 = vweird.f32 %v844
    %vm851 = vmor %vm849, %vm850
    %v852 = vsel %vm851, %v844, %v848
    %v853 = vand.u32 2147483647, %v766
    %vm854 = vcmp.eq.f32.partialorder %v853, 8.507059e+37
    %v855 = vand.u32 %v766, 2147483648
    %v856 = vor.u32 1.1754944e-38, %v855
    %v857 = vsel %vm854, %v856, %v852
    %v858 = vmul.f32 1.0, %v857
    %v859 = vrcp.pop %v767
    %v860 = vmul.f32 %v767, %v859
    %v861 = vsub.f32 1.0, %v860
    %v862 = vmul.f32 %v859, %v861
    %v863 = vadd.f32 %v859, %v862
    %vm864 = vweird.f32 %v767
    %vm865 = vweird.f32 %v859
    %vm866 = vmor %vm864, %vm865
    %v867 = vsel %vm866, %v859, %v863
    %v868 = vand.u32 2147483647, %v767
    %vm869 = vcmp.eq.f32.partialorder %v868, 8.507059e+37
    %v870 = vand.u32 %v767, 2147483648
    %v871 = vor.u32 1.1754944e-38, %v870
    %v872 = vsel %vm869, %v871, %v867
    %v873 = vmul.f32 1.0, %v872
    %v874 = vrcp.pop %v768
    %v875 = vmul.f32 %v768, %v874
    %v876 = vsub.f32 1.0, %v875
    %v877 = vmul.f32 %v874, %v876
    %v878 = vadd.f32 %v874, %v877
    %vm879 = vweird.f32 %v768
    %vm880 = vweird.f32 %v874
    %vm881 = vmor %vm879, %vm880
    %v882 = vsel %vm881, %v874, %v878
    %v883 = vand.u32 2147483647, %v768
    %vm884 = vcmp.eq.f32.partialorder %v883, 8.507059e+37
    %v885 = vand.u32 %v768, 2147483648
    %v886 = vor.u32 1.1754944e-38, %v885
    %v887 = vsel %vm884, %v886, %v882
    %v888 = vmul.f32 1.0, %v887
    %v889 = vtanh.pop %v729
    %v890 = vtanh.pop %v730
    %v891 = vtanh.pop %v731
    %v892 = vtanh.pop %v732
    %v893 = vtanh.pop %v733
    %v894 = vtanh.pop %v734
    %v895 = vtanh.pop %v735
    %v896 = vtanh.pop %v736
    %897 = vrot.lane.b32.xlu0 %v783, 96
    %v898 = vpop.permute.xlu0 %897
    %899 = vrot.lane.b32.xlu0 %v798, 96
    %v900 = vpop.permute.xlu0 %899
    %901 = vrot.lane.b32.xlu0 %v813, 96
    %v902 = vpop.permute.xlu0 %901
    %903 = vrot.lane.b32.xlu0 %v828, 96
    %v904 = vpop.permute.xlu0 %903
    %905 = vrot.lane.b32.xlu0 %v843, 96
    %v906 = vpop.permute.xlu0 %905
    %907 = vrot.lane.b32.xlu0 %v858, 96
    %v908 = vpop.permute.xlu0 %907
    %909 = vrot.lane.b32.xlu0 %v873, 96
    %v910 = vpop.permute.xlu0 %909
    %911 = vrot.lane.b32.xlu0 %v888, 96
    %v912 = vpop.permute.xlu0 %911
    %913 = vrot.lane.b32.xlu0 %v889, 64
    %v914 = vpop.permute.xlu0 %913
    %915 = vrot.lane.b32.xlu0 %v890, 64
    %v916 = vpop.permute.xlu0 %915
    %917 = vrot.lane.b32.xlu0 %v891, 64
    %v918 = vpop.permute.xlu0 %917
    %919 = vrot.lane.b32.xlu0 %v892, 64
    %v920 = vpop.permute.xlu0 %919
    %921 = vrot.lane.b32.xlu0 %v893, 64
    %v922 = vpop.permute.xlu0 %921
    %923 = vrot.lane.b32.xlu0 %v894, 64
    %v924 = vpop.permute.xlu0 %923
    %925 = vrot.lane.b32.xlu0 %v895, 64
    %v926 = vpop.permute.xlu0 %925
    %927 = vrot.lane.b32.xlu0 %v896, 64
    %v928 = vpop.permute.xlu0 %927
    %929 = vrot.lane.b32.xlu0 %v783, 32
    %v930 = vpop.permute.xlu0 %929
    %931 = vrot.lane.b32.xlu0 %v798, 32
    %v932 = vpop.permute.xlu0 %931
    %933 = vrot.lane.b32.xlu0 %v813, 32
    %v934 = vpop.permute.xlu0 %933
    %935 = vrot.lane.b32.xlu0 %v828, 32
    %v936 = vpop.permute.xlu0 %935
    %937 = vrot.lane.b32.xlu0 %v843, 32
    %v938 = vpop.permute.xlu0 %937
    %939 = vrot.lane.b32.xlu0 %v858, 32
    %v940 = vpop.permute.xlu0 %939
    %941 = vrot.lane.b32.xlu0 %v873, 32
    %v942 = vpop.permute.xlu0 %941
    %943 = vrot.lane.b32.xlu0 %v888, 32
    %v944 = vpop.permute.xlu0 %943
    %v945 = vmul.f32 %v898, %v655
    %v946 = vmul.f32 %v900, %v656
    %v947 = vmul.f32 %v902, %v657
    %v948 = vmul.f32 %v904, %v658
    %v949 = vmul.f32 %v906, %v659
    %v950 = vmul.f32 %v908, %v660
    %v951 = vmul.f32 %v910, %v661
    %v952 = vmul.f32 %v912, %v662
    %v953 = vmul.f32 %v783, %v914
    %v954 = vmul.f32 %v798, %v916
    %v955 = vmul.f32 %v813, %v918
    %v956 = vmul.f32 %v828, %v920
    %v957 = vmul.f32 %v843, %v922
    %v958 = vmul.f32 %v858, %v924
    %v959 = vmul.f32 %v873, %v926
    %v960 = vmul.f32 %v888, %v928
    %v961 = vadd.f32 %v945, %v953
    %v962 = vadd.f32 %v946, %v954
    %v963 = vadd.f32 %v947, %v955
    %v964 = vadd.f32 %v948, %v956
    %v965 = vadd.f32 %v949, %v957
    %v966 = vadd.f32 %v950, %v958
    %v967 = vadd.f32 %v951, %v959
    %v968 = vadd.f32 %v952, %v960
    %v969 = vtanh.pop %v961
    %v970 = vtanh.pop %v962
    %v971 = vtanh.pop %v963
    %v972 = vtanh.pop %v964
    %v973 = vtanh.pop %v965
    %v974 = vtanh.pop %v966
    %v975 = vtanh.pop %v967
    %v976 = vtanh.pop %v968
    %v977 = vmul.f32 %v930, %v969
    %v978 = vmul.f32 %v932, %v970
    %v979 = vmul.f32 %v934, %v971
    %v980 = vmul.f32 %v936, %v972
    %v981 = vmul.f32 %v938, %v973
    %v982 = vmul.f32 %v940, %v974
    %v983 = vmul.f32 %v942, %v975
    %v984 = vmul.f32 %v944, %v976
    %s985 = scalar_lea.vmem [#allocation3], 192
    %v986 = vld [vmem:[%s985] sm:$0xff]
    %v987 = vld [vmem:[%s985 + $0x8] sm:$0xff]
    %v988 = vld [vmem:[%s985 + $0x10] sm:$0xff]
    %v989 = vld [vmem:[%s985 + $0x18] sm:$0xff]
    %v990 = vld [vmem:[%s985 + $0x20] sm:$0xff]
    %v991 = vld [vmem:[%s985 + $0x28] sm:$0xff]
    %v992 = vld [vmem:[%s985 + $0x30] sm:$0xff]
    %v993 = vld [vmem:[%s985 + $0x38] sm:$0xff]
    %994 = vmatpush.msra.mxu0 %v67
    %995 = vmatpush.msra.mxu0 %v66
    %996 = vmatpush.msra.mxu0 %v65
    %997 = vmatpush.msra.mxu0 %v64
    %998 = vmatpush.msra.mxu0 %v63
    %999 = vmatpush.msra.mxu0 %v62
    %1000 = vmatpush.msra.mxu0 %v61
    %1001 = vmatpush.msra.mxu0 %v60
    %1002 = vmatpush.msra.mxu0 %v59
    %1003 = vmatpush.msra.mxu0 %v58
    %1004 = vmatpush.msra.mxu0 %v57
    %1005 = vmatpush.msra.mxu0 %v56
    %1006 = vmatpush.msra.mxu0 %v55
    %1007 = vmatpush.msra.mxu0 %v54
    %1008 = vmatpush.msra.mxu0 %v53
    %1009 = vmatpush.msra.mxu0 %v52
    %1010 = vmatmul.f32.gmra.mxu0 %v977
    %v1011 = vpop.f32.mrf.mxu0
    %v1012 = vadd.f32 0.0, %v1011
    %1013 = vmatmul.f32.gmra.mxu0 %v978
    %v1014 = vpop.f32.mrf.mxu0
    %v1015 = vadd.f32 0.0, %v1014
    %1016 = vmatmul.f32.gmra.mxu0 %v979
    %v1017 = vpop.f32.mrf.mxu0
    %v1018 = vadd.f32 0.0, %v1017
    %1019 = vmatmul.f32.gmra.mxu0 %v980
    %v1020 = vpop.f32.mrf.mxu0
    %v1021 = vadd.f32 0.0, %v1020
    %1022 = vmatmul.f32.gmra.mxu0 %v981
    %v1023 = vpop.f32.mrf.mxu0
    %v1024 = vadd.f32 0.0, %v1023
    %1025 = vmatmul.f32.gmra.mxu0 %v982
    %v1026 = vpop.f32.mrf.mxu0
    %v1027 = vadd.f32 0.0, %v1026
    %1028 = vmatmul.f32.gmra.mxu0 %v983
    %v1029 = vpop.f32.mrf.mxu0
    %v1030 = vadd.f32 0.0, %v1029
    %1031 = vmatmul.f32.gmra.mxu0 %v984
    %v1032 = vpop.f32.mrf.mxu0
    %v1033 = vadd.f32 0.0, %v1032
    %1034 = vdwg.mxu0
    %v1035 = vadd.f32 %v986, %v1012
    %v1036 = vadd.f32 %v987, %v1015
    %v1037 = vadd.f32 %v988, %v1018
    %v1038 = vadd.f32 %v989, %v1021
    %v1039 = vadd.f32 %v990, %v1024
    %v1040 = vadd.f32 %v991, %v1027
    %v1041 = vadd.f32 %v992, %v1030
    %v1042 = vadd.f32 %v993, %v1033
    %v1043 = vxor.u32 %v1035, 2147483648
    %v1044 = vxor.u32 %v1036, 2147483648
    %v1045 = vxor.u32 %v1037, 2147483648
    %v1046 = vxor.u32 %v1038, 2147483648
    %v1047 = vxor.u32 %v1039, 2147483648
    %v1048 = vxor.u32 %v1040, 2147483648
    %v1049 = vxor.u32 %v1041, 2147483648
    %v1050 = vxor.u32 %v1042, 2147483648
    %v1051 = vmul.f32 %v1043, 1.442695
    %v1052 = vpow.pop %v1051
    %v1053 = vmul.f32 %v1044, 1.442695
    %v1054 = vpow.pop %v1053
    %v1055 = vmul.f32 %v1045, 1.442695
    %v1056 = vpow.pop %v1055
    %v1057 = vmul.f32 %v1046, 1.442695
    %v1058 = vpow.pop %v1057
    %v1059 = vmul.f32 %v1047, 1.442695
    %v1060 = vpow.pop %v1059
    %v1061 = vmul.f32 %v1048, 1.442695
    %v1062 = vpow.pop %v1061
    %v1063 = vmul.f32 %v1049, 1.442695
    %v1064 = vpow.pop %v1063
    %v1065 = vmul.f32 %v1050, 1.442695
    %v1066 = vpow.pop %v1065
    %v1067 = vadd.f32 %v1052, 1.0
    %v1068 = vadd.f32 %v1054, 1.0
    %v1069 = vadd.f32 %v1056, 1.0
    %v1070 = vadd.f32 %v1058, 1.0
    %v1071 = vadd.f32 %v1060, 1.0
    %v1072 = vadd.f32 %v1062, 1.0
    %v1073 = vadd.f32 %v1064, 1.0
    %v1074 = vadd.f32 %v1066, 1.0
    %v1075 = vrcp.pop %v1067
    %v1076 = vmul.f32 %v1067, %v1075
    %v1077 = vsub.f32 1.0, %v1076
    %v1078 = vmul.f32 %v1075, %v1077
    %v1079 = vadd.f32 %v1075, %v1078
    %vm1080 = vweird.f32 %v1067
    %vm1081 = vweird.f32 %v1075
    %vm1082 = vmor %vm1080, %vm1081
    %v1083 = vsel %vm1082, %v1075, %v1079
    %v1084 = vand.u32 2147483647, %v1067
    %vm1085 = vcmp.eq.f32.partialorder %v1084, 8.507059e+37
    %v1086 = vand.u32 %v1067, 2147483648
    %v1087 = vor.u32 1.1754944e-38, %v1086
    %v1088 = vsel %vm1085, %v1087, %v1083
    %v1089 = vmul.f32 1.0, %v1088
    %v1090 = vrcp.pop %v1068
    %v1091 = vmul.f32 %v1068, %v1090
    %v1092 = vsub.f32 1.0, %v1091
    %v1093 = vmul.f32 %v1090, %v1092
    %v1094 = vadd.f32 %v1090, %v1093
    %vm1095 = vweird.f32 %v1068
    %vm1096 = vweird.f32 %v1090
    %vm1097 = vmor %vm1095, %vm1096
    %v1098 = vsel %vm1097, %v1090, %v1094
    %v1099 = vand.u32 2147483647, %v1068
    %vm1100 = vcmp.eq.f32.partialorder %v1099, 8.507059e+37
    %v1101 = vand.u32 %v1068, 2147483648
    %v1102 = vor.u32 1.1754944e-38, %v1101
    %v1103 = vsel %vm1100, %v1102, %v1098
    %v1104 = vmul.f32 1.0, %v1103
    %v1105 = vrcp.pop %v1069
    %v1106 = vmul.f32 %v1069, %v1105
    %v1107 = vsub.f32 1.0, %v1106
    %v1108 = vmul.f32 %v1105, %v1107
    %v1109 = vadd.f32 %v1105, %v1108
    %vm1110 = vweird.f32 %v1069
    %vm1111 = vweird.f32 %v1105
    %vm1112 = vmor %vm1110, %vm1111
    %v1113 = vsel %vm1112, %v1105, %v1109
    %v1114 = vand.u32 2147483647, %v1069
    %vm1115 = vcmp.eq.f32.partialorder %v1114, 8.507059e+37
    %v1116 = vand.u32 %v1069, 2147483648
    %v1117 = vor.u32 1.1754944e-38, %v1116
    %v1118 = vsel %vm1115, %v1117, %v1113
    %v1119 = vmul.f32 1.0, %v1118
    %v1120 = vrcp.pop %v1070
    %v1121 = vmul.f32 %v1070, %v1120
    %v1122 = vsub.f32 1.0, %v1121
    %v1123 = vmul.f32 %v1120, %v1122
    %v1124 = vadd.f32 %v1120, %v1123
    %vm1125 = vweird.f32 %v1070
    %vm1126 = vweird.f32 %v1120
    %vm1127 = vmor %vm1125, %vm1126
    %v1128 = vsel %vm1127, %v1120, %v1124
    %v1129 = vand.u32 2147483647, %v1070
    %vm1130 = vcmp.eq.f32.partialorder %v1129, 8.507059e+37
    %v1131 = vand.u32 %v1070, 2147483648
    %v1132 = vor.u32 1.1754944e-38, %v1131
    %v1133 = vsel %vm1130, %v1132, %v1128
    %v1134 = vmul.f32 1.0, %v1133
    %v1135 = vrcp.pop %v1071
    %v1136 = vmul.f32 %v1071, %v1135
    %v1137 = vsub.f32 1.0, %v1136
    %v1138 = vmul.f32 %v1135, %v1137
    %v1139 = vadd.f32 %v1135, %v1138
    %vm1140 = vweird.f32 %v1071
    %vm1141 = vweird.f32 %v1135
    %vm1142 = vmor %vm1140, %vm1141
    %v1143 = vsel %vm1142, %v1135, %v1139
    %v1144 = vand.u32 2147483647, %v1071
    %vm1145 = vcmp.eq.f32.partialorder %v1144, 8.507059e+37
    %v1146 = vand.u32 %v1071, 2147483648
    %v1147 = vor.u32 1.1754944e-38, %v1146
    %v1148 = vsel %vm1145, %v1147, %v1143
    %v1149 = vmul.f32 1.0, %v1148
    %v1150 = vrcp.pop %v1072
    %v1151 = vmul.f32 %v1072, %v1150
    %v1152 = vsub.f32 1.0, %v1151
    %v1153 = vmul.f32 %v1150, %v1152
    %v1154 = vadd.f32 %v1150, %v1153
    %vm1155 = vweird.f32 %v1072
    %vm1156 = vweird.f32 %v1150
    %vm1157 = vmor %vm1155, %vm1156
    %v1158 = vsel %vm1157, %v1150, %v1154
    %v1159 = vand.u32 2147483647, %v1072
    %vm1160 = vcmp.eq.f32.partialorder %v1159, 8.507059e+37
    %v1161 = vand.u32 %v1072, 2147483648
    %v1162 = vor.u32 1.1754944e-38, %v1161
    %v1163 = vsel %vm1160, %v1162, %v1158
    %v1164 = vmul.f32 1.0, %v1163
    %v1165 = vrcp.pop %v1073
    %v1166 = vmul.f32 %v1073, %v1165
    %v1167 = vsub.f32 1.0, %v1166
    %v1168 = vmul.f32 %v1165, %v1167
    %v1169 = vadd.f32 %v1165, %v1168
    %vm1170 = vweird.f32 %v1073
    %vm1171 = vweird.f32 %v1165
    %vm1172 = vmor %vm1170, %vm1171
    %v1173 = vsel %vm1172, %v1165, %v1169
    %v1174 = vand.u32 2147483647, %v1073
    %vm1175 = vcmp.eq.f32.partialorder %v1174, 8.507059e+37
    %v1176 = vand.u32 %v1073, 2147483648
    %v1177 = vor.u32 1.1754944e-38, %v1176
    %v1178 = vsel %vm1175, %v1177, %v1173
    %v1179 = vmul.f32 1.0, %v1178
    %v1180 = vrcp.pop %v1074
    %v1181 = vmul.f32 %v1074, %v1180
    %v1182 = vsub.f32 1.0, %v1181
    %v1183 = vmul.f32 %v1180, %v1182
    %v1184 = vadd.f32 %v1180, %v1183
    %vm1185 = vweird.f32 %v1074
    %vm1186 = vweird.f32 %v1180
    %vm1187 = vmor %vm1185, %vm1186
    %v1188 = vsel %vm1187, %v1180, %v1184
    %v1189 = vand.u32 2147483647, %v1074
    %vm1190 = vcmp.eq.f32.partialorder %v1189, 8.507059e+37
    %v1191 = vand.u32 %v1074, 2147483648
    %v1192 = vor.u32 1.1754944e-38, %v1191
    %v1193 = vsel %vm1190, %v1192, %v1188
    %v1194 = vmul.f32 1.0, %v1193
    %v1195 = vtanh.pop %v1035
    %v1196 = vtanh.pop %v1036
    %v1197 = vtanh.pop %v1037
    %v1198 = vtanh.pop %v1038
    %v1199 = vtanh.pop %v1039
    %v1200 = vtanh.pop %v1040
    %v1201 = vtanh.pop %v1041
    %v1202 = vtanh.pop %v1042
    %1203 = vrot.lane.b32.xlu0 %v1089, 96
    %v1204 = vpop.permute.xlu0 %1203
    %1205 = vrot.lane.b32.xlu0 %v1104, 96
    %v1206 = vpop.permute.xlu0 %1205
    %1207 = vrot.lane.b32.xlu0 %v1119, 96
    %v1208 = vpop.permute.xlu0 %1207
    %1209 = vrot.lane.b32.xlu0 %v1134, 96
    %v1210 = vpop.permute.xlu0 %1209
    %1211 = vrot.lane.b32.xlu0 %v1149, 96
    %v1212 = vpop.permute.xlu0 %1211
    %1213 = vrot.lane.b32.xlu0 %v1164, 96
    %v1214 = vpop.permute.xlu0 %1213
    %1215 = vrot.lane.b32.xlu0 %v1179, 96
    %v1216 = vpop.permute.xlu0 %1215
    %1217 = vrot.lane.b32.xlu0 %v1194, 96
    %v1218 = vpop.permute.xlu0 %1217
    %1219 = vrot.lane.b32.xlu0 %v1195, 64
    %v1220 = vpop.permute.xlu0 %1219
    %1221 = vrot.lane.b32.xlu0 %v1196, 64
    %v1222 = vpop.permute.xlu0 %1221
    %1223 = vrot.lane.b32.xlu0 %v1197, 64
    %v1224 = vpop.permute.xlu0 %1223
    %1225 = vrot.lane.b32.xlu0 %v1198, 64
    %v1226 = vpop.permute.xlu0 %1225
    %1227 = vrot.lane.b32.xlu0 %v1199, 64
    %v1228 = vpop.permute.xlu0 %1227
    %1229 = vrot.lane.b32.xlu0 %v1200, 64
    %v1230 = vpop.permute.xlu0 %1229
    %1231 = vrot.lane.b32.xlu0 %v1201, 64
    %v1232 = vpop.permute.xlu0 %1231
    %1233 = vrot.lane.b32.xlu0 %v1202, 64
    %v1234 = vpop.permute.xlu0 %1233
    %1235 = vrot.lane.b32.xlu0 %v1089, 32
    %v1236 = vpop.permute.xlu0 %1235
    %1237 = vrot.lane.b32.xlu0 %v1104, 32
    %v1238 = vpop.permute.xlu0 %1237
    %1239 = vrot.lane.b32.xlu0 %v1119, 32
    %v1240 = vpop.permute.xlu0 %1239
    %1241 = vrot.lane.b32.xlu0 %v1134, 32
    %v1242 = vpop.permute.xlu0 %1241
    %1243 = vrot.lane.b32.xlu0 %v1149, 32
    %v1244 = vpop.permute.xlu0 %1243
    %1245 = vrot.lane.b32.xlu0 %v1164, 32
    %v1246 = vpop.permute.xlu0 %1245
    %1247 = vrot.lane.b32.xlu0 %v1179, 32
    %v1248 = vpop.permute.xlu0 %1247
    %1249 = vrot.lane.b32.xlu0 %v1194, 32
    %v1250 = vpop.permute.xlu0 %1249
    %v1251 = vmul.f32 %v1204, %v961
    %v1252 = vmul.f32 %v1206, %v962
    %v1253 = vmul.f32 %v1208, %v963
    %v1254 = vmul.f32 %v1210, %v964
    %v1255 = vmul.f32 %v1212, %v965
    %v1256 = vmul.f32 %v1214, %v966
    %v1257 = vmul.f32 %v1216, %v967
    %v1258 = vmul.f32 %v1218, %v968
    %v1259 = vmul.f32 %v1089, %v1220
    %v1260 = vmul.f32 %v1104, %v1222
    %v1261 = vmul.f32 %v1119, %v1224
    %v1262 = vmul.f32 %v1134, %v1226
    %v1263 = vmul.f32 %v1149, %v1228
    %v1264 = vmul.f32 %v1164, %v1230
    %v1265 = vmul.f32 %v1179, %v1232
    %v1266 = vmul.f32 %v1194, %v1234
    %v1267 = vadd.f32 %v1251, %v1259
    %v1268 = vadd.f32 %v1252, %v1260
    %v1269 = vadd.f32 %v1253, %v1261
    %v1270 = vadd.f32 %v1254, %v1262
    %v1271 = vadd.f32 %v1255, %v1263
    %v1272 = vadd.f32 %v1256, %v1264
    %v1273 = vadd.f32 %v1257, %v1265
    %v1274 = vadd.f32 %v1258, %v1266
    %v1275 = vtanh.pop %v1267
    %v1276 = vtanh.pop %v1268
    %v1277 = vtanh.pop %v1269
    %v1278 = vtanh.pop %v1270
    %v1279 = vtanh.pop %v1271
    %v1280 = vtanh.pop %v1272
    %v1281 = vtanh.pop %v1273
    %v1282 = vtanh.pop %v1274
    %v1283 = vmul.f32 %v1236, %v1275
    %v1284 = vmul.f32 %v1238, %v1276
    %v1285 = vmul.f32 %v1240, %v1277
    %v1286 = vmul.f32 %v1242, %v1278
    %v1287 = vmul.f32 %v1244, %v1279
    %v1288 = vmul.f32 %v1246, %v1280
    %v1289 = vmul.f32 %v1248, %v1281
    %v1290 = vmul.f32 %v1250, %v1282
    %s1291 = scalar_lea.vmem [#allocation3], 256
    %v1292 = vld [vmem:[%s1291] sm:$0xff]
    %v1293 = vld [vmem:[%s1291 + $0x8] sm:$0xff]
    %v1294 = vld [vmem:[%s1291 + $0x10] sm:$0xff]
    %v1295 = vld [vmem:[%s1291 + $0x18] sm:$0xff]
    %v1296 = vld [vmem:[%s1291 + $0x20] sm:$0xff]
    %v1297 = vld [vmem:[%s1291 + $0x28] sm:$0xff]
    %v1298 = vld [vmem:[%s1291 + $0x30] sm:$0xff]
    %v1299 = vld [vmem:[%s1291 + $0x38] sm:$0xff]
    %1300 = vmatpush.msra.mxu0 %v67
    %1301 = vmatpush.msra.mxu0 %v66
    %1302 = vmatpush.msra.mxu0 %v65
    %1303 = vmatpush.msra.mxu0 %v64
    %1304 = vmatpush.msra.mxu0 %v63
    %1305 = vmatpush.msra.mxu0 %v62
    %1306 = vmatpush.msra.mxu0 %v61
    %1307 = vmatpush.msra.mxu0 %v60
    %1308 = vmatpush.msra.mxu0 %v59
    %1309 = vmatpush.msra.mxu0 %v58
    %1310 = vmatpush.msra.mxu0 %v57
    %1311 = vmatpush.msra.mxu0 %v56
    %1312 = vmatpush.msra.mxu0 %v55
    %1313 = vmatpush.msra.mxu0 %v54
    %1314 = vmatpush.msra.mxu0 %v53
    %1315 = vmatpush.msra.mxu0 %v52
    %1316 = vmatmul.f32.gmra.mxu0 %v1283
    %v1317 = vpop.f32.mrf.mxu0
    %v1318 = vadd.f32 0.0, %v1317
    %1319 = vmatmul.f32.gmra.mxu0 %v1284
    %v1320 = vpop.f32.mrf.mxu0
    %v1321 = vadd.f32 0.0, %v1320
    %1322 = vmatmul.f32.gmra.mxu0 %v1285
    %v1323 = vpop.f32.mrf.mxu0
    %v1324 = vadd.f32 0.0, %v1323
    %1325 = vmatmul.f32.gmra.mxu0 %v1286
    %v1326 = vpop.f32.mrf.mxu0
    %v1327 = vadd.f32 0.0, %v1326
    %1328 = vmatmul.f32.gmra.mxu0 %v1287
    %v1329 = vpop.f32.mrf.mxu0
    %v1330 = vadd.f32 0.0, %v1329
    %1331 = vmatmul.f32.gmra.mxu0 %v1288
    %v1332 = vpop.f32.mrf.mxu0
    %v1333 = vadd.f32 0.0, %v1332
    %1334 = vmatmul.f32.gmra.mxu0 %v1289
    %v1335 = vpop.f32.mrf.mxu0
    %v1336 = vadd.f32 0.0, %v1335
    %1337 = vmatmul.f32.gmra.mxu0 %v1290
    %v1338 = vpop.f32.mrf.mxu0
    %v1339 = vadd.f32 0.0, %v1338
    %1340 = vdwg.mxu0
    %v1341 = vadd.f32 %v1292, %v1318
    %v1342 = vadd.f32 %v1293, %v1321
    %v1343 = vadd.f32 %v1294, %v1324
    %v1344 = vadd.f32 %v1295, %v1327
    %v1345 = vadd.f32 %v1296, %v1330
    %v1346 = vadd.f32 %v1297, %v1333
    %v1347 = vadd.f32 %v1298, %v1336
    %v1348 = vadd.f32 %v1299, %v1339
    %v1349 = vxor.u32 %v1341, 2147483648
    %v1350 = vxor.u32 %v1342, 2147483648
    %v1351 = vxor.u32 %v1343, 2147483648
    %v1352 = vxor.u32 %v1344, 2147483648
    %v1353 = vxor.u32 %v1345, 2147483648
    %v1354 = vxor.u32 %v1346, 2147483648
    %v1355 = vxor.u32 %v1347, 2147483648
    %v1356 = vxor.u32 %v1348, 2147483648
    %v1357 = vmul.f32 %v1349, 1.442695
    %v1358 = vpow.pop %v1357
    %v1359 = vmul.f32 %v1350, 1.442695
    %v1360 = vpow.pop %v1359
    %v1361 = vmul.f32 %v1351, 1.442695
    %v1362 = vpow.pop %v1361
    %v1363 = vmul.f32 %v1352, 1.442695
    %v1364 = vpow.pop %v1363
    %v1365 = vmul.f32 %v1353, 1.442695
    %v1366 = vpow.pop %v1365
    %v1367 = vmul.f32 %v1354, 1.442695
    %v1368 = vpow.pop %v1367
    %v1369 = vmul.f32 %v1355, 1.442695
    %v1370 = vpow.pop %v1369
    %v1371 = vmul.f32 %v1356, 1.442695
    %v1372 = vpow.pop %v1371
    %v1373 = vadd.f32 %v1358, 1.0
    %v1374 = vadd.f32 %v1360, 1.0
    %v1375 = vadd.f32 %v1362, 1.0
    %v1376 = vadd.f32 %v1364, 1.0
    %v1377 = vadd.f32 %v1366, 1.0
    %v1378 = vadd.f32 %v1368, 1.0
    %v1379 = vadd.f32 %v1370, 1.0
    %v1380 = vadd.f32 %v1372, 1.0
    %v1381 = vrcp.pop %v1373
    %v1382 = vmul.f32 %v1373, %v1381
    %v1383 = vsub.f32 1.0, %v1382
    %v1384 = vmul.f32 %v1381, %v1383
    %v1385 = vadd.f32 %v1381, %v1384
    %vm1386 = vweird.f32 %v1373
    %vm1387 = vweird.f32 %v1381
    %vm1388 = vmor %vm1386, %vm1387
    %v1389 = vsel %vm1388, %v1381, %v1385
    %v1390 = vand.u32 2147483647, %v1373
    %vm1391 = vcmp.eq.f32.partialorder %v1390, 8.507059e+37
    %v1392 = vand.u32 %v1373, 2147483648
    %v1393 = vor.u32 1.1754944e-38, %v1392
    %v1394 = vsel %vm1391, %v1393, %v1389
    %v1395 = vmul.f32 1.0, %v1394
    %v1396 = vrcp.pop %v1374
    %v1397 = vmul.f32 %v1374, %v1396
    %v1398 = vsub.f32 1.0, %v1397
    %v1399 = vmul.f32 %v1396, %v1398
    %v1400 = vadd.f32 %v1396, %v1399
    %vm1401 = vweird.f32 %v1374
    %vm1402 = vweird.f32 %v1396
    %vm1403 = vmor %vm1401, %vm1402
    %v1404 = vsel %vm1403, %v1396, %v1400
    %v1405 = vand.u32 2147483647, %v1374
    %vm1406 = vcmp.eq.f32.partialorder %v1405, 8.507059e+37
    %v1407 = vand.u32 %v1374, 2147483648
    %v1408 = vor.u32 1.1754944e-38, %v1407
    %v1409 = vsel %vm1406, %v1408, %v1404
    %v1410 = vmul.f32 1.0, %v1409
    %v1411 = vrcp.pop %v1375
    %v1412 = vmul.f32 %v1375, %v1411
    %v1413 = vsub.f32 1.0, %v1412
    %v1414 = vmul.f32 %v1411, %v1413
    %v1415 = vadd.f32 %v1411, %v1414
    %vm1416 = vweird.f32 %v1375
    %vm1417 = vweird.f32 %v1411
    %vm1418 = vmor %vm1416, %vm1417
    %v1419 = vsel %vm1418, %v1411, %v1415
    %v1420 = vand.u32 2147483647, %v1375
    %vm1421 = vcmp.eq.f32.partialorder %v1420, 8.507059e+37
    %v1422 = vand.u32 %v1375, 2147483648
    %v1423 = vor.u32 1.1754944e-38, %v1422
    %v1424 = vsel %vm1421, %v1423, %v1419
    %v1425 = vmul.f32 1.0, %v1424
    %v1426 = vrcp.pop %v1376
    %v1427 = vmul.f32 %v1376, %v1426
    %v1428 = vsub.f32 1.0, %v1427
    %v1429 = vmul.f32 %v1426, %v1428
    %v1430 = vadd.f32 %v1426, %v1429
    %vm1431 = vweird.f32 %v1376
    %vm1432 = vweird.f32 %v1426
    %vm1433 = vmor %vm1431, %vm1432
    %v1434 = vsel %vm1433, %v1426, %v1430
    %v1435 = vand.u32 2147483647, %v1376
    %vm1436 = vcmp.eq.f32.partialorder %v1435, 8.507059e+37
    %v1437 = vand.u32 %v1376, 2147483648
    %v1438 = vor.u32 1.1754944e-38, %v1437
    %v1439 = vsel %vm1436, %v1438, %v1434
    %v1440 = vmul.f32 1.0, %v1439
    %v1441 = vrcp.pop %v1377
    %v1442 = vmul.f32 %v1377, %v1441
    %v1443 = vsub.f32 1.0, %v1442
    %v1444 = vmul.f32 %v1441, %v1443
    %v1445 = vadd.f32 %v1441, %v1444
    %vm1446 = vweird.f32 %v1377
    %vm1447 = vweird.f32 %v1441
    %vm1448 = vmor %vm1446, %vm1447
    %v1449 = vsel %vm1448, %v1441, %v1445
    %v1450 = vand.u32 2147483647, %v1377
    %vm1451 = vcmp.eq.f32.partialorder %v1450, 8.507059e+37
    %v1452 = vand.u32 %v1377, 2147483648
    %v1453 = vor.u32 1.1754944e-38, %v1452
    %v1454 = vsel %vm1451, %v1453, %v1449
    %v1455 = vmul.f32 1.0, %v1454
    %v1456 = vrcp.pop %v1378
    %v1457 = vmul.f32 %v1378, %v1456
    %v1458 = vsub.f32 1.0, %v1457
    %v1459 = vmul.f32 %v1456, %v1458
    %v1460 = vadd.f32 %v1456, %v1459
    %vm1461 = vweird.f32 %v1378
    %vm1462 = vweird.f32 %v1456
    %vm1463 = vmor %vm1461, %vm1462
    %v1464 = vsel %vm1463, %v1456, %v1460
    %v1465 = vand.u32 2147483647, %v1378
    %vm1466 = vcmp.eq.f32.partialorder %v1465, 8.507059e+37
    %v1467 = vand.u32 %v1378, 2147483648
    %v1468 = vor.u32 1.1754944e-38, %v1467
    %v1469 = vsel %vm1466, %v1468, %v1464
    %v1470 = vmul.f32 1.0, %v1469
    %v1471 = vrcp.pop %v1379
    %v1472 = vmul.f32 %v1379, %v1471
    %v1473 = vsub.f32 1.0, %v1472
    %v1474 = vmul.f32 %v1471, %v1473
    %v1475 = vadd.f32 %v1471, %v1474
    %vm1476 = vweird.f32 %v1379
    %vm1477 = vweird.f32 %v1471
    %vm1478 = vmor %vm1476, %vm1477
    %v1479 = vsel %vm1478, %v1471, %v1475
    %v1480 = vand.u32 2147483647, %v1379
    %vm1481 = vcmp.eq.f32.partialorder %v1480, 8.507059e+37
    %v1482 = vand.u32 %v1379, 2147483648
    %v1483 = vor.u32 1.1754944e-38, %v1482
    %v1484 = vsel %vm1481, %v1483, %v1479
    %v1485 = vmul.f32 1.0, %v1484
    %v1486 = vrcp.pop %v1380
    %v1487 = vmul.f32 %v1380, %v1486
    %v1488 = vsub.f32 1.0, %v1487
    %v1489 = vmul.f32 %v1486, %v1488
    %v1490 = vadd.f32 %v1486, %v1489
    %vm1491 = vweird.f32 %v1380
    %vm1492 = vweird.f32 %v1486
    %vm1493 = vmor %vm1491, %vm1492
    %v1494 = vsel %vm1493, %v1486, %v1490
    %v1495 = vand.u32 2147483647, %v1380
    %vm1496 = vcmp.eq.f32.partialorder %v1495, 8.507059e+37
    %v1497 = vand.u32 %v1380, 2147483648
    %v1498 = vor.u32 1.1754944e-38, %v1497
    %v1499 = vsel %vm1496, %v1498, %v1494
    %v1500 = vmul.f32 1.0, %v1499
    %v1501 = vtanh.pop %v1341
    %v1502 = vtanh.pop %v1342
    %v1503 = vtanh.pop %v1343
    %v1504 = vtanh.pop %v1344
    %v1505 = vtanh.pop %v1345
    %v1506 = vtanh.pop %v1346
    %v1507 = vtanh.pop %v1347
    %v1508 = vtanh.pop %v1348
    %1509 = vrot.lane.b32.xlu0 %v1395, 96
    %v1510 = vpop.permute.xlu0 %1509
    %1511 = vrot.lane.b32.xlu0 %v1410, 96
    %v1512 = vpop.permute.xlu0 %1511
    %1513 = vrot.lane.b32.xlu0 %v1425, 96
    %v1514 = vpop.permute.xlu0 %1513
    %1515 = vrot.lane.b32.xlu0 %v1440, 96
    %v1516 = vpop.permute.xlu0 %1515
    %1517 = vrot.lane.b32.xlu0 %v1455, 96
    %v1518 = vpop.permute.xlu0 %1517
    %1519 = vrot.lane.b32.xlu0 %v1470, 96
    %v1520 = vpop.permute.xlu0 %1519
    %1521 = vrot.lane.b32.xlu0 %v1485, 96
    %v1522 = vpop.permute.xlu0 %1521
    %1523 = vrot.lane.b32.xlu0 %v1500, 96
    %v1524 = vpop.permute.xlu0 %1523
    %1525 = vrot.lane.b32.xlu0 %v1501, 64
    %v1526 = vpop.permute.xlu0 %1525
    %1527 = vrot.lane.b32.xlu0 %v1502, 64
    %v1528 = vpop.permute.xlu0 %1527
    %1529 = vrot.lane.b32.xlu0 %v1503, 64
    %v1530 = vpop.permute.xlu0 %1529
    %1531 = vrot.lane.b32.xlu0 %v1504, 64
    %v1532 = vpop.permute.xlu0 %1531
    %1533 = vrot.lane.b32.xlu0 %v1505, 64
    %v1534 = vpop.permute.xlu0 %1533
    %1535 = vrot.lane.b32.xlu0 %v1506, 64
    %v1536 = vpop.permute.xlu0 %1535
    %1537 = vrot.lane.b32.xlu0 %v1507, 64
    %v1538 = vpop.permute.xlu0 %1537
    %1539 = vrot.lane.b32.xlu0 %v1508, 64
    %v1540 = vpop.permute.xlu0 %1539
    %1541 = vrot.lane.b32.xlu0 %v1395, 32
    %v1542 = vpop.permute.xlu0 %1541
    %1543 = vrot.lane.b32.xlu0 %v1410, 32
    %v1544 = vpop.permute.xlu0 %1543
    %1545 = vrot.lane.b32.xlu0 %v1425, 32
    %v1546 = vpop.permute.xlu0 %1545
    %1547 = vrot.lane.b32.xlu0 %v1440, 32
    %v1548 = vpop.permute.xlu0 %1547
    %1549 = vrot.lane.b32.xlu0 %v1455, 32
    %v1550 = vpop.permute.xlu0 %1549
    %1551 = vrot.lane.b32.xlu0 %v1470, 32
    %v1552 = vpop.permute.xlu0 %1551
    %1553 = vrot.lane.b32.xlu0 %v1485, 32
    %v1554 = vpop.permute.xlu0 %1553
    %1555 = vrot.lane.b32.xlu0 %v1500, 32
    %v1556 = vpop.permute.xlu0 %1555
    %v1557 = vmul.f32 %v1510, %v1267
    %v1558 = vmul.f32 %v1512, %v1268
    %v1559 = vmul.f32 %v1514, %v1269
    %v1560 = vmul.f32 %v1516, %v1270
    %v1561 = vmul.f32 %v1518, %v1271
    %v1562 = vmul.f32 %v1520, %v1272
    %v1563 = vmul.f32 %v1522, %v1273
    %v1564 = vmul.f32 %v1524, %v1274
    %v1565 = vmul.f32 %v1395, %v1526
    %v1566 = vmul.f32 %v1410, %v1528
    %v1567 = vmul.f32 %v1425, %v1530
    %v1568 = vmul.f32 %v1440, %v1532
    %v1569 = vmul.f32 %v1455, %v1534
    %v1570 = vmul.f32 %v1470, %v1536
    %v1571 = vmul.f32 %v1485, %v1538
    %v1572 = vmul.f32 %v1500, %v1540
    %v1573 = vadd.f32 %v1557, %v1565
    %v1574 = vadd.f32 %v1558, %v1566
    %v1575 = vadd.f32 %v1559, %v1567
    %v1576 = vadd.f32 %v1560, %v1568
    %v1577 = vadd.f32 %v1561, %v1569
    %v1578 = vadd.f32 %v1562, %v1570
    %v1579 = vadd.f32 %v1563, %v1571
    %v1580 = vadd.f32 %v1564, %v1572
    %v1581 = vtanh.pop %v1573
    %v1582 = vtanh.pop %v1574
    %v1583 = vtanh.pop %v1575
    %v1584 = vtanh.pop %v1576
    %v1585 = vtanh.pop %v1577
    %v1586 = vtanh.pop %v1578
    %v1587 = vtanh.pop %v1579
    %v1588 = vtanh.pop %v1580
    %v1589 = vmul.f32 %v1542, %v1581
    %v1590 = vmul.f32 %v1544, %v1582
    %v1591 = vmul.f32 %v1546, %v1583
    %v1592 = vmul.f32 %v1548, %v1584
    %v1593 = vmul.f32 %v1550, %v1585
    %v1594 = vmul.f32 %v1552, %v1586
    %v1595 = vmul.f32 %v1554, %v1587
    %v1596 = vmul.f32 %v1556, %v1588
    %s1597 = scalar_lea.vmem [#allocation3], 320
    %v1598 = vld [vmem:[%s1597] sm:$0xff]
    %v1599 = vld [vmem:[%s1597 + $0x8] sm:$0xff]
    %v1600 = vld [vmem:[%s1597 + $0x10] sm:$0xff]
    %v1601 = vld [vmem:[%s1597 + $0x18] sm:$0xff]
    %v1602 = vld [vmem:[%s1597 + $0x20] sm:$0xff]
    %v1603 = vld [vmem:[%s1597 + $0x28] sm:$0xff]
    %v1604 = vld [vmem:[%s1597 + $0x30] sm:$0xff]
    %v1605 = vld [vmem:[%s1597 + $0x38] sm:$0xff]
    %1606 = vmatpush.msra.mxu0 %v67
    %1607 = vmatpush.msra.mxu0 %v66
    %1608 = vmatpush.msra.mxu0 %v65
    %1609 = vmatpush.msra.mxu0 %v64
    %1610 = vmatpush.msra.mxu0 %v63
    %1611 = vmatpush.msra.mxu0 %v62
    %1612 = vmatpush.msra.mxu0 %v61
    %1613 = vmatpush.msra.mxu0 %v60
    %1614 = vmatpush.msra.mxu0 %v59
    %1615 = vmatpush.msra.mxu0 %v58
    %1616 = vmatpush.msra.mxu0 %v57
    %1617 = vmatpush.msra.mxu0 %v56
    %1618 = vmatpush.msra.mxu0 %v55
    %1619 = vmatpush.msra.mxu0 %v54
    %1620 = vmatpush.msra.mxu0 %v53
    %1621 = vmatpush.msra.mxu0 %v52
    %1622 = vmatmul.f32.gmra.mxu0 %v1589
    %v1623 = vpop.f32.mrf.mxu0
    %v1624 = vadd.f32 0.0, %v1623
    %1625 = vmatmul.f32.gmra.mxu0 %v1590
    %v1626 = vpop.f32.mrf.mxu0
    %v1627 = vadd.f32 0.0, %v1626
    %1628 = vmatmul.f32.gmra.mxu0 %v1591
    %v1629 = vpop.f32.mrf.mxu0
    %v1630 = vadd.f32 0.0, %v1629
    %1631 = vmatmul.f32.gmra.mxu0 %v1592
    %v1632 = vpop.f32.mrf.mxu0
    %v1633 = vadd.f32 0.0, %v1632
    %1634 = vmatmul.f32.gmra.mxu0 %v1593
    %v1635 = vpop.f32.mrf.mxu0
    %v1636 = vadd.f32 0.0, %v1635
    %1637 = vmatmul.f32.gmra.mxu0 %v1594
    %v1638 = vpop.f32.mrf.mxu0
    %v1639 = vadd.f32 0.0, %v1638
    %1640 = vmatmul.f32.gmra.mxu0 %v1595
    %v1641 = vpop.f32.mrf.mxu0
    %v1642 = vadd.f32 0.0, %v1641
    %1643 = vmatmul.f32.gmra.mxu0 %v1596
    %v1644 = vpop.f32.mrf.mxu0
    %v1645 = vadd.f32 0.0, %v1644
    %1646 = vdwg.mxu0
    %v1647 = vadd.f32 %v1598, %v1624
    %v1648 = vadd.f32 %v1599, %v1627
    %v1649 = vadd.f32 %v1600, %v1630
    %v1650 = vadd.f32 %v1601, %v1633
    %v1651 = vadd.f32 %v1602, %v1636
    %v1652 = vadd.f32 %v1603, %v1639
    %v1653 = vadd.f32 %v1604, %v1642
    %v1654 = vadd.f32 %v1605, %v1645
    %v1655 = vxor.u32 %v1647, 2147483648
    %v1656 = vxor.u32 %v1648, 2147483648
    %v1657 = vxor.u32 %v1649, 2147483648
    %v1658 = vxor.u32 %v1650, 2147483648
    %v1659 = vxor.u32 %v1651, 2147483648
    %v1660 = vxor.u32 %v1652, 2147483648
    %v1661 = vxor.u32 %v1653, 2147483648
    %v1662 = vxor.u32 %v1654, 2147483648
    %v1663 = vmul.f32 %v1655, 1.442695
    %v1664 = vpow.pop %v1663
    %v1665 = vmul.f32 %v1656, 1.442695
    %v1666 = vpow.pop %v1665
    %v1667 = vmul.f32 %v1657, 1.442695
    %v1668 = vpow.pop %v1667
    %v1669 = vmul.f32 %v1658, 1.442695
    %v1670 = vpow.pop %v1669
    %v1671 = vmul.f32 %v1659, 1.442695
    %v1672 = vpow.pop %v1671
    %v1673 = vmul.f32 %v1660, 1.442695
    %v1674 = vpow.pop %v1673
    %v1675 = vmul.f32 %v1661, 1.442695
    %v1676 = vpow.pop %v1675
    %v1677 = vmul.f32 %v1662, 1.442695
    %v1678 = vpow.pop %v1677
    %v1679 = vadd.f32 %v1664, 1.0
    %v1680 = vadd.f32 %v1666, 1.0
    %v1681 = vadd.f32 %v1668, 1.0
    %v1682 = vadd.f32 %v1670, 1.0
    %v1683 = vadd.f32 %v1672, 1.0
    %v1684 = vadd.f32 %v1674, 1.0
    %v1685 = vadd.f32 %v1676, 1.0
    %v1686 = vadd.f32 %v1678, 1.0
    %v1687 = vrcp.pop %v1679
    %v1688 = vmul.f32 %v1679, %v1687
    %v1689 = vsub.f32 1.0, %v1688
    %v1690 = vmul.f32 %v1687, %v1689
    %v1691 = vadd.f32 %v1687, %v1690
    %vm1692 = vweird.f32 %v1679
    %vm1693 = vweird.f32 %v1687
    %vm1694 = vmor %vm1692, %vm1693
    %v1695 = vsel %vm1694, %v1687, %v1691
    %v1696 = vand.u32 2147483647, %v1679
    %vm1697 = vcmp.eq.f32.partialorder %v1696, 8.507059e+37
    %v1698 = vand.u32 %v1679, 2147483648
    %v1699 = vor.u32 1.1754944e-38, %v1698
    %v1700 = vsel %vm1697, %v1699, %v1695
    %v1701 = vmul.f32 1.0, %v1700
    %v1702 = vrcp.pop %v1680
    %v1703 = vmul.f32 %v1680, %v1702
    %v1704 = vsub.f32 1.0, %v1703
    %v1705 = vmul.f32 %v1702, %v1704
    %v1706 = vadd.f32 %v1702, %v1705
    %vm1707 = vweird.f32 %v1680
    %vm1708 = vweird.f32 %v1702
    %vm1709 = vmor %vm1707, %vm1708
    %v1710 = vsel %vm1709, %v1702, %v1706
    %v1711 = vand.u32 2147483647, %v1680
    %vm1712 = vcmp.eq.f32.partialorder %v1711, 8.507059e+37
    %v1713 = vand.u32 %v1680, 2147483648
    %v1714 = vor.u32 1.1754944e-38, %v1713
    %v1715 = vsel %vm1712, %v1714, %v1710
    %v1716 = vmul.f32 1.0, %v1715
    %v1717 = vrcp.pop %v1681
    %v1718 = vmul.f32 %v1681, %v1717
    %v1719 = vsub.f32 1.0, %v1718
    %v1720 = vmul.f32 %v1717, %v1719
    %v1721 = vadd.f32 %v1717, %v1720
    %vm1722 = vweird.f32 %v1681
    %vm1723 = vweird.f32 %v1717
    %vm1724 = vmor %vm1722, %vm1723
    %v1725 = vsel %vm1724, %v1717, %v1721
    %v1726 = vand.u32 2147483647, %v1681
    %vm1727 = vcmp.eq.f32.partialorder %v1726, 8.507059e+37
    %v1728 = vand.u32 %v1681, 2147483648
    %v1729 = vor.u32 1.1754944e-38, %v1728
    %v1730 = vsel %vm1727, %v1729, %v1725
    %v1731 = vmul.f32 1.0, %v1730
    %v1732 = vrcp.pop %v1682
    %v1733 = vmul.f32 %v1682, %v1732
    %v1734 = vsub.f32 1.0, %v1733
    %v1735 = vmul.f32 %v1732, %v1734
    %v1736 = vadd.f32 %v1732, %v1735
    %vm1737 = vweird.f32 %v1682
    %vm1738 = vweird.f32 %v1732
    %vm1739 = vmor %vm1737, %vm1738
    %v1740 = vsel %vm1739, %v1732, %v1736
    %v1741 = vand.u32 2147483647, %v1682
    %vm1742 = vcmp.eq.f32.partialorder %v1741, 8.507059e+37
    %v1743 = vand.u32 %v1682, 2147483648
    %v1744 = vor.u32 1.1754944e-38, %v1743
    %v1745 = vsel %vm1742, %v1744, %v1740
    %v1746 = vmul.f32 1.0, %v1745
    %v1747 = vrcp.pop %v1683
    %v1748 = vmul.f32 %v1683, %v1747
    %v1749 = vsub.f32 1.0, %v1748
    %v1750 = vmul.f32 %v1747, %v1749
    %v1751 = vadd.f32 %v1747, %v1750
    %vm1752 = vweird.f32 %v1683
    %vm1753 = vweird.f32 %v1747
    %vm1754 = vmor %vm1752, %vm1753
    %v1755 = vsel %vm1754, %v1747, %v1751
    %v1756 = vand.u32 2147483647, %v1683
    %vm1757 = vcmp.eq.f32.partialorder %v1756, 8.507059e+37
    %v1758 = vand.u32 %v1683, 2147483648
    %v1759 = vor.u32 1.1754944e-38, %v1758
    %v1760 = vsel %vm1757, %v1759, %v1755
    %v1761 = vmul.f32 1.0, %v1760
    %v1762 = vrcp.pop %v1684
    %v1763 = vmul.f32 %v1684, %v1762
    %v1764 = vsub.f32 1.0, %v1763
    %v1765 = vmul.f32 %v1762, %v1764
    %v1766 = vadd.f32 %v1762, %v1765
    %vm1767 = vweird.f32 %v1684
    %vm1768 = vweird.f32 %v1762
    %vm1769 = vmor %vm1767, %vm1768
    %v1770 = vsel %vm1769, %v1762, %v1766
    %v1771 = vand.u32 2147483647, %v1684
    %vm1772 = vcmp.eq.f32.partialorder %v1771, 8.507059e+37
    %v1773 = vand.u32 %v1684, 2147483648
    %v1774 = vor.u32 1.1754944e-38, %v1773
    %v1775 = vsel %vm1772, %v1774, %v1770
    %v1776 = vmul.f32 1.0, %v1775
    %v1777 = vrcp.pop %v1685
    %v1778 = vmul.f32 %v1685, %v1777
    %v1779 = vsub.f32 1.0, %v1778
    %v1780 = vmul.f32 %v1777, %v1779
    %v1781 = vadd.f32 %v1777, %v1780
    %vm1782 = vweird.f32 %v1685
    %vm1783 = vweird.f32 %v1777
    %vm1784 = vmor %vm1782, %vm1783
    %v1785 = vsel %vm1784, %v1777, %v1781
    %v1786 = vand.u32 2147483647, %v1685
    %vm1787 = vcmp.eq.f32.partialorder %v1786, 8.507059e+37
    %v1788 = vand.u32 %v1685, 2147483648
    %v1789 = vor.u32 1.1754944e-38, %v1788
    %v1790 = vsel %vm1787, %v1789, %v1785
    %v1791 = vmul.f32 1.0, %v1790
    %v1792 = vrcp.pop %v1686
    %v1793 = vmul.f32 %v1686, %v1792
    %v1794 = vsub.f32 1.0, %v1793
    %v1795 = vmul.f32 %v1792, %v1794
    %v1796 = vadd.f32 %v1792, %v1795
    %vm1797 = vweird.f32 %v1686
    %vm1798 = vweird.f32 %v1792
    %vm1799 = vmor %vm1797, %vm1798
    %v1800 = vsel %vm1799, %v1792, %v1796
    %v1801 = vand.u32 2147483647, %v1686
    %vm1802 = vcmp.eq.f32.partialorder %v1801, 8.507059e+37
    %v1803 = vand.u32 %v1686, 2147483648
    %v1804 = vor.u32 1.1754944e-38, %v1803
    %v1805 = vsel %vm1802, %v1804, %v1800
    %v1806 = vmul.f32 1.0, %v1805
    %v1807 = vtanh.pop %v1647
    %v1808 = vtanh.pop %v1648
    %v1809 = vtanh.pop %v1649
    %v1810 = vtanh.pop %v1650
    %v1811 = vtanh.pop %v1651
    %v1812 = vtanh.pop %v1652
    %v1813 = vtanh.pop %v1653
    %v1814 = vtanh.pop %v1654
    %1815 = vrot.lane.b32.xlu0 %v1701, 96
    %v1816 = vpop.permute.xlu0 %1815
    %1817 = vrot.lane.b32.xlu0 %v1716, 96
    %v1818 = vpop.permute.xlu0 %1817
    %1819 = vrot.lane.b32.xlu0 %v1731, 96
    %v1820 = vpop.permute.xlu0 %1819
    %1821 = vrot.lane.b32.xlu0 %v1746, 96
    %v1822 = vpop.permute.xlu0 %1821
    %1823 = vrot.lane.b32.xlu0 %v1761, 96
    %v1824 = vpop.permute.xlu0 %1823
    %1825 = vrot.lane.b32.xlu0 %v1776, 96
    %v1826 = vpop.permute.xlu0 %1825
    %1827 = vrot.lane.b32.xlu0 %v1791, 96
    %v1828 = vpop.permute.xlu0 %1827
    %1829 = vrot.lane.b32.xlu0 %v1806, 96
    %v1830 = vpop.permute.xlu0 %1829
    %1831 = vrot.lane.b32.xlu0 %v1807, 64
    %v1832 = vpop.permute.xlu0 %1831
    %1833 = vrot.lane.b32.xlu0 %v1808, 64
    %v1834 = vpop.permute.xlu0 %1833
    %1835 = vrot.lane.b32.xlu0 %v1809, 64
    %v1836 = vpop.permute.xlu0 %1835
    %1837 = vrot.lane.b32.xlu0 %v1810, 64
    %v1838 = vpop.permute.xlu0 %1837
    %1839 = vrot.lane.b32.xlu0 %v1811, 64
    %v1840 = vpop.permute.xlu0 %1839
    %1841 = vrot.lane.b32.xlu0 %v1812, 64
    %v1842 = vpop.permute.xlu0 %1841
    %1843 = vrot.lane.b32.xlu0 %v1813, 64
    %v1844 = vpop.permute.xlu0 %1843
    %1845 = vrot.lane.b32.xlu0 %v1814, 64
    %v1846 = vpop.permute.xlu0 %1845
    %1847 = vrot.lane.b32.xlu0 %v1701, 32
    %v1848 = vpop.permute.xlu0 %1847
    %1849 = vrot.lane.b32.xlu0 %v1716, 32
    %v1850 = vpop.permute.xlu0 %1849
    %1851 = vrot.lane.b32.xlu0 %v1731, 32
    %v1852 = vpop.permute.xlu0 %1851
    %1853 = vrot.lane.b32.xlu0 %v1746, 32
    %v1854 = vpop.permute.xlu0 %1853
    %1855 = vrot.lane.b32.xlu0 %v1761, 32
    %v1856 = vpop.permute.xlu0 %1855
    %1857 = vrot.lane.b32.xlu0 %v1776, 32
    %v1858 = vpop.permute.xlu0 %1857
    %1859 = vrot.lane.b32.xlu0 %v1791, 32
    %v1860 = vpop.permute.xlu0 %1859
    %1861 = vrot.lane.b32.xlu0 %v1806, 32
    %v1862 = vpop.permute.xlu0 %1861
    %v1863 = vmul.f32 %v1816, %v1573
    %v1864 = vmul.f32 %v1818, %v1574
    %v1865 = vmul.f32 %v1820, %v1575
    %v1866 = vmul.f32 %v1822, %v1576
    %v1867 = vmul.f32 %v1824, %v1577
    %v1868 = vmul.f32 %v1826, %v1578
    %v1869 = vmul.f32 %v1828, %v1579
    %v1870 = vmul.f32 %v1830, %v1580
    %v1871 = vmul.f32 %v1701, %v1832
    %v1872 = vmul.f32 %v1716, %v1834
    %v1873 = vmul.f32 %v1731, %v1836
    %v1874 = vmul.f32 %v1746, %v1838
    %v1875 = vmul.f32 %v1761, %v1840
    %v1876 = vmul.f32 %v1776, %v1842
    %v1877 = vmul.f32 %v1791, %v1844
    %v1878 = vmul.f32 %v1806, %v1846
    %v1879 = vadd.f32 %v1863, %v1871
    %v1880 = vadd.f32 %v1864, %v1872
    %v1881 = vadd.f32 %v1865, %v1873
    %v1882 = vadd.f32 %v1866, %v1874
    %v1883 = vadd.f32 %v1867, %v1875
    %v1884 = vadd.f32 %v1868, %v1876
    %v1885 = vadd.f32 %v1869, %v1877
    %v1886 = vadd.f32 %v1870, %v1878
    %v1887 = vtanh.pop %v1879
    %v1888 = vtanh.pop %v1880
    %v1889 = vtanh.pop %v1881
    %v1890 = vtanh.pop %v1882
    %v1891 = vtanh.pop %v1883
    %v1892 = vtanh.pop %v1884
    %v1893 = vtanh.pop %v1885
    %v1894 = vtanh.pop %v1886
    %v1895 = vmul.f32 %v1848, %v1887
    %v1896 = vmul.f32 %v1850, %v1888
    %v1897 = vmul.f32 %v1852, %v1889
    %v1898 = vmul.f32 %v1854, %v1890
    %v1899 = vmul.f32 %v1856, %v1891
    %v1900 = vmul.f32 %v1858, %v1892
    %v1901 = vmul.f32 %v1860, %v1893
    %v1902 = vmul.f32 %v1862, %v1894
    %v1903 = vld [vmem:[%s2] sm:$0x1]
    %v1905 = vperm.slane %v1903, 0
    %v1907 = vmul.f32 %v1895, %v1905
    %v1908 = vmul.f32 %v1896, %v1905
    %v1909 = vmul.f32 %v1897, %v1905
    %v1910 = vmul.f32 %v1898, %v1905
    %v1911 = vmul.f32 %v1899, %v1905
    %v1912 = vmul.f32 %v1900, %v1905
    %v1913 = vmul.f32 %v1901, %v1905
    %v1914 = vmul.f32 %v1902, %v1905
    %1915 = vadd.xlane.f32.xlu0 %v1907
    %v1916 = vpop.xlane.xlu0 %1915
    %1917 = vadd.xlane.f32.xlu0 %v1908
    %v1918 = vpop.xlane.xlu0 %1917
    %1919 = vadd.xlane.f32.xlu0 %v1909
    %v1920 = vpop.xlane.xlu0 %1919
    %1921 = vadd.xlane.f32.xlu0 %v1910
    %v1922 = vpop.xlane.xlu0 %1921
    %1923 = vadd.xlane.f32.xlu0 %v1911
    %v1924 = vpop.xlane.xlu0 %1923
    %1925 = vadd.xlane.f32.xlu0 %v1912
    %v1926 = vpop.xlane.xlu0 %1925
    %1927 = vadd.xlane.f32.xlu0 %v1913
    %v1928 = vpop.xlane.xlu0 %1927
    %1929 = vadd.xlane.f32.xlu0 %v1914
    %v1930 = vpop.xlane.xlu0 %1929
    %v1931 = vld [vmem:[#allocation2] sm:$0x1]
    %v1933 = vperm.slane %v1931, 0
    %v1935 = vadd.f32 %v1916, %v1933
    %v1936 = vadd.f32 %v1918, %v1933
    %v1937 = vadd.f32 %v1920, %v1933
    %v1938 = vadd.f32 %v1922, %v1933
    %v1939 = vadd.f32 %v1924, %v1933
    %v1940 = vadd.f32 %v1926, %v1933
    %v1941 = vadd.f32 %v1928, %v1933
    %v1942 = vadd.f32 %v1930, %v1933
    %1944 = vset.pattern.permute.xlu0 0
    %1945 = vperm.xlu0 %1944, %v1935
    %v1946 = vpop.permute.xlu0 %1945
    %1949 = vset.pattern.permute.xlu0 0
    %1950 = vperm.xlu0 %1949, %v1936
    %v1951 = vpop.permute.xlu0 %1950
    %1954 = vset.pattern.permute.xlu0 0
    %1955 = vperm.xlu0 %1954, %v1937
    %v1956 = vpop.permute.xlu0 %1955
    %1959 = vset.pattern.permute.xlu0 0
    %1960 = vperm.xlu0 %1959, %v1938
    %v1961 = vpop.permute.xlu0 %1960
    %1964 = vset.pattern.permute.xlu0 0
    %1965 = vperm.xlu0 %1964, %v1939
    %v1966 = vpop.permute.xlu0 %1965
    %1969 = vset.pattern.permute.xlu0 0
    %1970 = vperm.xlu0 %1969, %v1940
    %v1971 = vpop.permute.xlu0 %1970
    %1974 = vset.pattern.permute.xlu0 0
    %1975 = vperm.xlu0 %1974, %v1941
    %v1976 = vpop.permute.xlu0 %1975
    %1979 = vset.pattern.permute.xlu0 0
    %1980 = vperm.xlu0 %1979, %v1942
    %v1981 = vpop.permute.xlu0 %1980
    %1983 = vst [vmem:[#allocation8] sm:$0xff] %v1946
    %1984 = vst [vmem:[#allocation8 + $0x8] sm:$0xff] %v1951
    %1985 = vst [vmem:[#allocation8 + $0x10] sm:$0xff] %v1956
    %1986 = vst [vmem:[#allocation8 + $0x18] sm:$0xff] %v1961
    %1987 = vst [vmem:[#allocation8 + $0x20] sm:$0xff] %v1966
    %1988 = vst [vmem:[#allocation8 + $0x28] sm:$0xff] %v1971
    %1989 = vst [vmem:[#allocation8 + $0x30] sm:$0xff] %v1976
    %1990 = vst [vmem:[#allocation8 + $0x38] sm:$0xff] %v1981
    // Predicated region
    $region26: #{tpu_custom_call.1} parent=1 // pred_check
      _
    $region27: #{tpu_custom_call.1} parent=1 // pred_check_branch
      %1992 = sbr.rel (0) target = $region29
    $region28: #{tpu_custom_call.1} parent=1 // pred_region
      %1994 = vsyncadd [#allocation5], 0
      %s1995 = sshll.u32 [#allocation8], 4
      %s1996 = int_to_ptr.vmem [resolvable:$true] %s1995
      %s1997 = sshll.u32 %s4, 4
      %s1998 = int_to_ptr.hbm [resolvable:$true] %s1997
      %2003 = dma.vmem_to_hbm [thread:$0]  %s1996, 1024, %s1998, [#allocation5], 128, 128, 8
    $region29: #{tpu_custom_call.1} parent=1 // pred_fallthru
      _
    // Predicated region
    $region30: #{tpu_custom_call.1} parent=1 // pred_check
      _
    $region31: #{tpu_custom_call.1} parent=1 // pred_check_branch
      %2005 = sbr.rel (0) target = $region33
    $region32: #{tpu_custom_call.1} parent=1 // pred_region
      %2007 = dma.done [#allocation5], 1024
    $region33: #{tpu_custom_call.1} parent=1 // pred_fallthru
      _
    %2008 = vsyncpa [#allocation4], 1
    %2009 = vsyncpa [#allocation7], 1
    %2010 = vsyncpa [#allocation5], 1

</llo_original>
